<compile_context>
chip_gen: v7x
topology: tpu7x:2x2x1
jax: 0.10.0
libtpu: 0.0.40
codegen_flags: <defaults>
</compile_context>

<pallas_src>
import functools

import jax
import jax.numpy as jnp
from jax import lax
from jax.experimental import pallas as pl
from jax.experimental.pallas import tpu as pltpu


# ----------------------------------------------------------------------------
# Fused ConvTranspose2d Pallas kernel (one batch element per grid step)
# ----------------------------------------------------------------------------
def _conv_transpose_kernel(x_ref, w_ref, b_ref, o_ref, acc_ref, *,
                           H, W, S, Dq, Cout):
    """x_ref:   (H*W, Cin)              input pixels, channels-last rows
       w_ref:   (Cin, Kpad*Kpad*Cout)   taps, lane order (dy, dx, ry, rx, co)
       b_ref:   (1, 1, S*S*Cout)        bias tiled over (ry, rx)
       o_ref:   (Hq, Wq, S*S*Cout)      sub-pixel-layout output, Hq = H+Dq-1
       acc_ref: (Hq, Wq, S*S*Cout) f32  VMEM scratch accumulator
    """
    S2C = S * S * Cout

    # MXU: every kernel tap for every input pixel in a single matmul.
    c = jnp.dot(x_ref[...], w_ref[...], preferred_element_type=jnp.float32)
    # Split the row dim (h*W + w) -> (h, w); the lane dim is untouched.
    c3 = c.reshape(H, W, Dq * Dq * S2C)

    acc_ref[...] = jnp.zeros_like(acc_ref)

    # Sub-pixel scatter: tap group (dy, dx) -> unstrided shifted slice add.
    for dy in range(Dq):
        for dx in range(Dq):
            blk = dy * Dq + dx
            contrib = c3[:, :, blk * S2C:(blk + 1) * S2C]      # (H, W, S*S*Cout)
            acc_ref[dy:dy + H, dx:dx + W, :] += contrib

    o_ref[...] = (acc_ref[...] + b_ref[...]).astype(o_ref.dtype)


# ----------------------------------------------------------------------------
# Wrapper: weight repack + pallas_call + sub-pixel un-interleave
# ----------------------------------------------------------------------------
def _prep_weight(weight, stride):
    """(Cin, Cout, K, K) PyTorch ConvTranspose2d weight -> (Cin, Kpad*Kpad*Cout)
    with lane order (dy, dx, ry, rx, cout), where ky = dy*S + ry,
    kx = dx*S + rx, and taps >= K are zero-padded (handles K % S != 0)."""
    Cin, Cout, K, _ = weight.shape
    S = stride
    Dq = -(-K // S)                      # ceil(K / S)
    Kpad = Dq * S
    wpad = jnp.pad(weight, ((0, 0), (0, 0), (0, Kpad - K), (0, Kpad - K)))
    w6 = wpad.reshape(Cin, Cout, Dq, S, Dq, S)        # (ci, co, dy, ry, dx, rx)
    w6 = jnp.transpose(w6, (0, 2, 4, 3, 5, 1))        # (ci, dy, dx, ry, rx, co)
    return w6.reshape(Cin, Kpad * Kpad * Cout)


def upsample_forward(x_nchw, weight, bias, *, stride):
    """Forward of Upsample: nn.ConvTranspose2d(kernel, stride), padding=0."""
    N, Cin, H, W = x_nchw.shape
    w_cin, Cout, K, Kw = weight.shape
    assert w_cin == Cin and K == Kw
    S = int(stride)
    Dq = -(-K // S)
    Kpad = Dq * S
    Hq, Wq = H + Dq - 1, W + Dq - 1
    S2C = S * S * Cout
    Hout, Wout = (H - 1) * S + K, (W - 1) * S + K

    wmat = _prep_weight(weight, S)                                # (Cin, Kpad^2*Cout)
    b_tiled = jnp.tile(bias, S * S).reshape(1, 1, S2C)
    x_rows = jnp.transpose(x_nchw, (0, 2, 3, 1)).reshape(N, H * W, Cin)

    kernel = functools.partial(_conv_transpose_kernel,
                               H=H, W=W, S=S, Dq=Dq, Cout=Cout)
    out_sub = pl.pallas_call(
        kernel,
        out_shape=jax.ShapeDtypeStruct((N, Hq, Wq, S2C), x_nchw.dtype),
        grid=(N,),
        in_specs=[
            pl.BlockSpec((None, H * W, Cin), lambda n: (n, 0, 0)),
            pl.BlockSpec((Cin, Kpad * Kpad * Cout), lambda n: (0, 0)),
            pl.BlockSpec((1, 1, S2C), lambda n: (0, 0, 0)),
        ],
        out_specs=pl.BlockSpec((None, Hq, Wq, S2C), lambda n: (n, 0, 0, 0)),
        scratch_shapes=[pltpu.VMEM((Hq, Wq, S2C), jnp.float32)],
        compiler_params=pltpu.CompilerParams(dimension_semantics=("parallel",)),
    )(x_rows, wmat, b_tiled)

    # Sub-pixel -> spatial un-interleave, fused with the NHWC->NCHW transpose.
    out6 = out_sub.reshape(N, Hq, Wq, S, S, Cout)      # (n, qy, qx, ry, rx, co)
    out = jnp.transpose(out6, (0, 5, 1, 3, 2, 4)).reshape(N, Cout, Hq * S, Wq * S)
    return out[:, :, :Hout, :Wout]


# ----------------------------------------------------------------------------
# Pure-JAX reference (fractionally-strided conv) for verification
# ----------------------------------------------------------------------------
def _reference(x, weight, bias, *, stride):
    Cin, Cout, K, _ = weight.shape
    w_oihw = jnp.transpose(jnp.flip(weight, axis=(2, 3)), (1, 0, 2, 3))
    y = lax.conv_general_dilated(
        x, w_oihw, window_strides=(1, 1),
        padding=[(K - 1, K - 1), (K - 1, K - 1)],
        lhs_dilation=(stride, stride),
        dimension_numbers=("NCHW", "OIHW", "NCHW"))
    return y + bias.reshape(1, -1, 1, 1)


# ----------------------------------------------------------------------------
if __name__ == "__main__":
    def run_case(key, *, N, Cin, Cout, H, W, K, S):
        k1, k2, k3 = jax.random.split(key, 3)
        x = jax.random.normal(k1, (N, Cin, H, W), jnp.float32)
        w = jax.random.normal(k2, (Cin, Cout, K, K), jnp.float32)
        w = w / jnp.sqrt(float(Cin * K * K))
        b = jax.random.uniform(k3, (Cout,), jnp.float32, -0.1, 0.1)

        fwd = jax.jit(functools.partial(upsample_forward, stride=S))
        out = jax.block_until_ready(fwd(x, w, b))
        ref = jax.block_until_ready(_reference(x, w, b, stride=S))

        Hout, Wout = (H - 1) * S + K, (W - 1) * S + K
        assert out.shape == (N, Cout, Hout, Wout), out.shape
        err = float(jnp.max(jnp.abs(out - ref)))
        assert jnp.allclose(out, ref, atol=3e-3, rtol=3e-3), err

    key = jax.random.PRNGKey(0)
    k1, k2 = jax.random.split(key)
    # Upsample(input_dim=4, output_dim=8, kernel=4, stride=2) on (2, 4, 16, 16).
    run_case(k1, N=2, Cin=4, Cout=8, H=16, W=16, K=4, S=2)
    # kernel not a multiple of stride -> exercises the zero-padded-tap path.
    run_case(k2, N=2, Cin=4, Cout=8, H=16, W=16, K=3, S=2)

    print("KERNEL_OK")
</pallas_src>

<mosaic_0001>
module attributes {stable_mosaic.version = 11 : i64} {
  func.func @_conv_transpose_kernel(%arg0: i32, %arg1: memref<1x256x4xf32, #tpu.memory_space<vmem>>, %arg2: memref<4x128xf32, #tpu.memory_space<vmem>>, %arg3: memref<1x1x32xf32, #tpu.memory_space<vmem>>, %arg4: memref<1x17x17x32xf32, #tpu.memory_space<vmem>>, %arg5: memref<17x17x32xf32, #tpu.memory_space<vmem>>) attributes {dimension_semantics = [#tpu.dimension_semantics<parallel>], iteration_bounds = array<i64: 2>, scalar_prefetch = 0 : i64, scratch_operands = 1 : i64, tpu.core_type = #tpu.core_type<tc>, window_params = [{transform_indices = @transform_0, window_bounds = array<i64: 1, 256, 4>}, {pipeline_mode = #tpu.pipeline_mode<synchronous>, transform_indices = @transform_1, window_bounds = array<i64: 4, 128>}, {pipeline_mode = #tpu.pipeline_mode<synchronous>, transform_indices = @transform_2, window_bounds = array<i64: 1, 1, 32>}, {transform_indices = @transform_3, window_bounds = array<i64: 1, 17, 17, 32>}]} {
    %c0 = arith.constant 0 : index
    %c0_0 = arith.constant 0 : index
    %c0_1 = arith.constant 0 : index
    %0 = vector.load %arg1[%c0, %c0_0, %c0_1] : memref<1x256x4xf32, #tpu.memory_space<vmem>>, vector<1x256x4xf32>
    %1 = vector.shape_cast %0 : vector<1x256x4xf32> to vector<256x4xf32>
    %c0_2 = arith.constant 0 : index
    %c0_3 = arith.constant 0 : index
    %2 = vector.load %arg2[%c0_2, %c0_3] : memref<4x128xf32, #tpu.memory_space<vmem>>, vector<4x128xf32>
    %cst = arith.constant dense<0.000000e+00> : vector<256x128xf32>
    %3 = tpu.matmul %1, %2, %cst {dimension_numbers = #tpu.dot_dimension_numbers<[1], [0], [0], [1], [0, 0, 1, 1], [], []>} : vector<256x4xf32>, vector<4x128xf32>, vector<256x128xf32> -> vector<256x128xf32>
    %4 = vector.shape_cast %3 : vector<256x128xf32> to vector<16x16x128xf32>
    %cst_4 = arith.constant 0.000000e+00 : f32
    %5 = vector.broadcast %cst_4 : f32 to vector<17x17x32xf32>
    %c0_5 = arith.constant 0 : index
    %c0_6 = arith.constant 0 : index
    %c0_7 = arith.constant 0 : index
    %6 = vector.load %arg5[%c0_5, %c0_6, %c0_7] : memref<17x17x32xf32, #tpu.memory_space<vmem>>, vector<17x17x32xf32>
    tpu.vector_store %arg5[%c0_5, %c0_6, %c0_7], %5 {strides = array<i32>} : memref<17x17x32xf32, #tpu.memory_space<vmem>>, vector<17x17x32xf32>,
    %7 = vector.extract_strided_slice %4 {offsets = [0, 0, 0], sizes = [16, 16, 32], strides = [1, 1, 1]} : vector<16x16x128xf32> to vector<16x16x32xf32>
    %c0_8 = arith.constant 0 : index
    %c0_9 = arith.constant 0 : index
    %c0_10 = arith.constant 0 : index
    %8 = vector.load %arg5[%c0_8, %c0_9, %c0_10] : memref<17x17x32xf32, #tpu.memory_space<vmem>>, vector<16x16x32xf32>
    %9 = arith.addf %8, %7 : vector<16x16x32xf32>
    %c0_11 = arith.constant 0 : index
    %c0_12 = arith.constant 0 : index
    %c0_13 = arith.constant 0 : index
    %10 = vector.load %arg5[%c0_11, %c0_12, %c0_13] : memref<17x17x32xf32, #tpu.memory_space<vmem>>, vector<16x16x32xf32>
    tpu.vector_store %arg5[%c0_11, %c0_12, %c0_13], %9 {strides = array<i32>} : memref<17x17x32xf32, #tpu.memory_space<vmem>>, vector<16x16x32xf32>,
    %11 = vector.extract_strided_slice %4 {offsets = [0, 0, 32], sizes = [16, 16, 32], strides = [1, 1, 1]} : vector<16x16x128xf32> to vector<16x16x32xf32>
    %c0_14 = arith.constant 0 : index
    %c1 = arith.constant 1 : index
    %c0_15 = arith.constant 0 : index
    %12 = vector.load %arg5[%c0_14, %c1, %c0_15] : memref<17x17x32xf32, #tpu.memory_space<vmem>>, vector<16x16x32xf32>
    %13 = arith.addf %12, %11 : vector<16x16x32xf32>
    %c0_16 = arith.constant 0 : index
    %c1_17 = arith.constant 1 : index
    %c0_18 = arith.constant 0 : index
    %14 = vector.load %arg5[%c0_16, %c1_17, %c0_18] : memref<17x17x32xf32, #tpu.memory_space<vmem>>, vector<16x16x32xf32>
    tpu.vector_store %arg5[%c0_16, %c1_17, %c0_18], %13 {strides = array<i32>} : memref<17x17x32xf32, #tpu.memory_space<vmem>>, vector<16x16x32xf32>,
    %15 = vector.extract_strided_slice %4 {offsets = [0, 0, 64], sizes = [16, 16, 32], strides = [1, 1, 1]} : vector<16x16x128xf32> to vector<16x16x32xf32>
    %c1_19 = arith.constant 1 : index
    %c0_20 = arith.constant 0 : index
    %c0_21 = arith.constant 0 : index
    %16 = vector.load %arg5[%c1_19, %c0_20, %c0_21] : memref<17x17x32xf32, #tpu.memory_space<vmem>>, vector<16x16x32xf32>
    %17 = arith.addf %16, %15 : vector<16x16x32xf32>
    %c1_22 = arith.constant 1 : index
    %c0_23 = arith.constant 0 : index
    %c0_24 = arith.constant 0 : index
    %18 = vector.load %arg5[%c1_22, %c0_23, %c0_24] : memref<17x17x32xf32, #tpu.memory_space<vmem>>, vector<16x16x32xf32>
    tpu.vector_store %arg5[%c1_22, %c0_23, %c0_24], %17 {strides = array<i32>} : memref<17x17x32xf32, #tpu.memory_space<vmem>>, vector<16x16x32xf32>,
    %19 = vector.extract_strided_slice %4 {offsets = [0, 0, 96], sizes = [16, 16, 32], strides = [1, 1, 1]} : vector<16x16x128xf32> to vector<16x16x32xf32>
    %c1_25 = arith.constant 1 : index
    %c1_26 = arith.constant 1 : index
    %c0_27 = arith.constant 0 : index
    %20 = vector.load %arg5[%c1_25, %c1_26, %c0_27] : memref<17x17x32xf32, #tpu.memory_space<vmem>>, vector<16x16x32xf32>
    %21 = arith.addf %20, %19 : vector<16x16x32xf32>
    %c1_28 = arith.constant 1 : index
    %c1_29 = arith.constant 1 : index
    %c0_30 = arith.constant 0 : index
    %22 = vector.load %arg5[%c1_28, %c1_29, %c0_30] : memref<17x17x32xf32, #tpu.memory_space<vmem>>, vector<16x16x32xf32>
    tpu.vector_store %arg5[%c1_28, %c1_29, %c0_30], %21 {strides = array<i32>} : memref<17x17x32xf32, #tpu.memory_space<vmem>>, vector<16x16x32xf32>,
    %c0_31 = arith.constant 0 : index
    %c0_32 = arith.constant 0 : index
    %c0_33 = arith.constant 0 : index
    %23 = vector.load %arg5[%c0_31, %c0_32, %c0_33] : memref<17x17x32xf32, #tpu.memory_space<vmem>>, vector<17x17x32xf32>
    %c0_34 = arith.constant 0 : index
    %c0_35 = arith.constant 0 : index
    %c0_36 = arith.constant 0 : index
    %24 = vector.load %arg3[%c0_34, %c0_35, %c0_36] : memref<1x1x32xf32, #tpu.memory_space<vmem>>, vector<1x1x32xf32>
    %25 = vector.broadcast %24 : vector<1x1x32xf32> to vector<17x17x32xf32>
    %26 = arith.addf %23, %25 : vector<17x17x32xf32>
    %c0_37 = arith.constant 0 : index
    %c0_38 = arith.constant 0 : index
    %c0_39 = arith.constant 0 : index
    %c0_40 = arith.constant 0 : index
    %27 = vector.load %arg4[%c0_37, %c0_38, %c0_39, %c0_40] : memref<1x17x17x32xf32, #tpu.memory_space<vmem>>, vector<1x17x17x32xf32>
    %28 = vector.shape_cast %27 : vector<1x17x17x32xf32> to vector<17x17x32xf32>
    %29 = vector.shape_cast %26 : vector<17x17x32xf32> to vector<1x17x17x32xf32>
    tpu.vector_store %arg4[%c0_37, %c0_38, %c0_39, %c0_40], %29 {strides = array<i32>} : memref<1x17x17x32xf32, #tpu.memory_space<vmem>>, vector<1x17x17x32xf32>,
    return
  }
  func.func @transform_0(%arg0: i32) -> (i32, i32, i32) {
    %c0_i32 = arith.constant 0 : i32
    %c0_i32_0 = arith.constant 0 : i32
    %c0_i32_1 = arith.constant 0 : i32
    return %arg0, %c0_i32, %c0_i32_0 : i32, i32, i32
  }
  func.func @transform_1(%arg0: i32) -> (i32, i32) {
    %c0_i32 = arith.constant 0 : i32
    %c0_i32_0 = arith.constant 0 : i32
    %c0_i32_1 = arith.constant 0 : i32
    return %c0_i32, %c0_i32_0 : i32, i32
  }
  func.func @transform_2(%arg0: i32) -> (i32, i32, i32) {
    %c0_i32 = arith.constant 0 : i32
    %c0_i32_0 = arith.constant 0 : i32
    %c0_i32_1 = arith.constant 0 : i32
    %c0_i32_2 = arith.constant 0 : i32
    return %c0_i32, %c0_i32_0, %c0_i32_1 : i32, i32, i32
  }
  func.func @transform_3(%arg0: i32) -> (i32, i32, i32, i32) {
    %c0_i32 = arith.constant 0 : i32
    %c0_i32_0 = arith.constant 0 : i32
    %c0_i32_1 = arith.constant 0 : i32
    %c0_i32_2 = arith.constant 0 : i32
    return %arg0, %c0_i32, %c0_i32_0, %c0_i32_1 : i32, i32, i32, i32
  }
}

</mosaic_0001>

<llo_original>
// kernel: tile.9
$region0: #{tile.9}
  %s0 = inlined_call_operand.vmem [shape: f32[4,8], index: 0, kind: input, shape index: {}]
  %s1 = inlined_call_operand.vmem [shape: f32[1,1,32], index: 1, kind: output, shape index: {}]
  $region1: #{tile.9} parent=0
    #allocation0 [shape = 'u8[4096]{0}', space=vmem, size = 0x1000, scoped, tag = 'scoped mem for output reshape']
    #allocation1 [shape = 'u8[4096]{0}', space=vmem, size = 0x1000, scoped, tag = 'scoped mem for input reshape']
    %s3 = sshllo.u32 0, 4
    %v4 = vld [vmem:[%s0] sm:%s3]
    %5 = vst [vmem:[#allocation1] sm:%s3] %v4
    %v6 = vld [vmem:[#allocation1] sm:$0x1]
    %vm7 = vcmask 64512
    %8 = vst.msk [vmem:[#allocation0] sm:$0x1] %vm7, %v6
    %s9 = scalar_lea.vmem [#allocation1], 3
    %v10 = vld [vmem:[%s9] sm:$0x1]
    %11 = vrot.lane.b32.xlu0 %v10, 24
    %v12 = vpop.permute.xlu0 %11
    %vm13 = vcmask 261312
    %14 = vst.msk [vmem:[#allocation0] sm:$0x1] %vm13, %v12
    %s15 = scalar_lea.vmem [#allocation1], 2
    %v16 = vld [vmem:[%s15] sm:$0x1]
    %17 = vrot.lane.b32.xlu0 %v16, 16
    %v18 = vpop.permute.xlu0 %17
    %vm19 = vcmask 195712
    %20 = vst.msk [vmem:[#allocation0] sm:$0x1] %vm19, %v18
    %s21 = scalar_lea.vmem [#allocation1], 1
    %v22 = vld [vmem:[%s21] sm:$0x1]
    %23 = vrot.lane.b32.xlu0 %v22, 8
    %v24 = vpop.permute.xlu0 %23
    %vm25 = vcmask 130112
    %26 = vst.msk [vmem:[#allocation0] sm:$0x1] %vm25, %v24
    %s28 = sshllo.u32 0, 1
    %v30 = vld [vmem:[#allocation0] sm:%s28]
    %s31 = sshllo.u32 0, 1
    %32 = vst [vmem:[%s1] sm:%s31] %v30

// kernel: tile.8
$region0: #{tile.8}
  #allocation2 [shape = 's32[1]{0}', space=sflag, size = 0x4, scoped, tag = 'scoped memory for tile.8']
  %s0 = inlined_call_operand.hbm [shape: f32[8], index: 0, kind: input, shape index: {}]
  %s1 = inlined_call_operand.vmem [shape: f32[4,8], index: 1, kind: output, shape index: {}]
  $region1: #{tile.8} parent=0
    #allocation0 [shape = 'u8[512]{0}', space=vmem, size = 0x400, scoped, tag = 'operand span for operand 0']
    #allocation1 [shape = 's32[1]{0}', space=sflag, size = 0x4, scoped, tag = 'scoped memory for tile.8']
    %2 = vsyncpa [#allocation1], 0
    // Predicated region
    $region2: #{tile.8} parent=1 // pred_check
      _
    $region3: #{tile.8} parent=1 // pred_check_branch
      %4 = sbr.rel (0) target = $region5
    $region4: #{tile.8} parent=1 // pred_region
      %s6 = ssub.s32 16, 16
      %7 = vsyncadd [#allocation1], %s6
      %s9 = sshll.u32 [#allocation0], 4
      %s10 = int_to_ptr.vmem [resolvable:$true] %s9
      %12 = dma.hbm_to_vmem [thread:$0]  %s0, 16, %s10, [#allocation1]
    $region5: #{tile.8} parent=1 // pred_fallthru
      _
    // Predicated region
    $region6: #{tile.8} parent=1 // pred_check
      _
    $region7: #{tile.8} parent=1 // pred_check_branch
      %14 = sbr.rel (0) target = $region9
    $region8: #{tile.8} parent=1 // pred_region
      %15 = dma.done [#allocation1], 16
    $region9: #{tile.8} parent=1 // pred_fallthru
      _
    %v16 = vld [vmem:[#allocation0] ss:$0 sm:$0xff]
    %17 = vst [vmem:[%s1] sm:$0xf] %v16
    %18 = vsyncpa [#allocation1], 1

// kernel: upsample_forward.1
$region0: #{upsample_forward.1}
  #allocation0 [shape = 'u32[]', space=smem, size = 0x4, offset = 0x4, fixed_abs, tag = 'smem constant byte address 0x4 - core index']
  #allocation1 [shape = 'u32[144,128]{1,0:T(1,128)}', space=vmem, size = 0x12000, scoped, tag = 'internal scratch']
  #allocation2 [shape = 'f32[17,17,32]{2,1,0:T(8,128)}', space=vmem, size = 0x33000, scoped, tag = 'scratch operand']
  %s0 = inlined_call_operand.vmem [shape: f32[2,256,4], index: 0, kind: input, shape index: {}]
  %s1 = inlined_call_operand.vmem [shape: f32[4,128], index: 1, kind: input, shape index: {}]
  %s2 = inlined_call_operand.vmem [shape: f32[1,1,32], index: 2, kind: input, shape index: {}]
  %s3 = inlined_call_operand.vmem [shape: f32[2,17,17,32], index: 3, kind: output, shape index: {}]
  %s4 = sld [smem:[#allocation0]]
  $region45: #{upsample_forward.1} parent=0
    _
  %s6 = ssub.s32 1, %s4
  %s7 = scalar_select 0, %s6, %s4
  loop: start=0, step=1, limit=4
  $region2: #{upsample_forward.1} parent=0 // loop_pre_header
    _
  $region3: #{upsample_forward.1} parent=0 // loop_header
    %s9 = sphi 0, %s13
    %p10 = scmp.ge.s32.totalorder %s9, 4
    %s19 = sphi 0, %s21
    %s22 = sphi 0, %s19
    %s23 = sphi 0, %s22
    %s39 = sphi 0, %s23
    %s43 = sphi 0, %s43
    %s45 = sphi 0, %s43
    %s46 = sphi 0, %s45
    %s60 = sphi 0, %s46
    %s64 = sphi 0, %s64
    %s66 = sphi 0, %s64
    %s67 = sphi 0, %s66
    %s81 = sphi 0, %s67
    %s87 = sphi 0, %s89
    %s90 = sphi 0, %s87
    %s91 = sphi 0, %s90
    %s107 = sphi 0, %s91
  $region4: #{upsample_forward.1} parent=0 // loop_header_branch
    %12 = sbr.rel (%p10) target = $region8
  $region5: #{upsample_forward.1} parent=0 // loop_body
    %s14 = ssub.s32 %s9, 1
    %s15 = ssub.s32 %s9, 2
    %s16 = sadd.s32 %s9, 1
    %s17 = ssub.s32 %s9, %s16
    %p18 = scmp.eq.s32.totalorder %s17, 0
    %s20 = sadd.s32 %s19, 1
    %s21 = scalar_select %p18, %s19, %s20
    %p24 = pneg %p18
    %p25 = scmp.eq.s32.totalorder %s9, 1
    %p26 = por %p24, %p25
    %p27 = scmp.ne.s32.totalorder %s19, %s22
    %p28 = scmp.eq.s32.totalorder %s9, 0
    %p29 = por %p27, %p28
    %p30 = scmp.ne.s32.totalorder %s19, %s22
    %p31 = scmp.eq.s32.totalorder %s14, 1
    %p32 = por %p30, %p31
    %p33 = scmp.ne.s32.totalorder %s22, %s23
    %p34 = scmp.eq.s32.totalorder %s14, 0
    %p35 = por %p33, %p34
    %p36 = scmp.ne.s32.totalorder %s22, %s23
    %p37 = scmp.eq.s32.totalorder %s15, 1
    %p38 = por %p36, %p37
    %p40 = scmp.ne.s32.totalorder %s23, %s39
    %p41 = scmp.eq.s32.totalorder %s15, 0
    %p42 = por %p40, %p41
    %s44 = sadd.s32 %s43, 1
    %p47 = scmp.eq.s32.totalorder %s9, 1
    %p48 = scmp.ne.s32.totalorder %s43, %s45
    %p49 = scmp.eq.s32.totalorder %s9, 0
    %p50 = por %p48, %p49
    %p51 = scmp.ne.s32.totalorder %s43, %s45
    %p52 = scmp.eq.s32.totalorder %s14, 1
    %p53 = por %p51, %p52
    %p54 = scmp.ne.s32.totalorder %s45, %s46
    %p55 = scmp.eq.s32.totalorder %s14, 0
    %p56 = por %p54, %p55
    %p57 = scmp.ne.s32.totalorder %s45, %s46
    %p58 = scmp.eq.s32.totalorder %s15, 1
    %p59 = por %p57, %p58
    %p61 = scmp.ne.s32.totalorder %s46, %s60
    %p62 = scmp.eq.s32.totalorder %s15, 0
    %p63 = por %p61, %p62
    %s65 = sadd.s32 %s64, 1
    %p68 = scmp.eq.s32.totalorder %s9, 1
    %p69 = scmp.ne.s32.totalorder %s64, %s66
    %p70 = scmp.eq.s32.totalorder %s9, 0
    %p71 = por %p69, %p70
    %p72 = scmp.ne.s32.totalorder %s64, %s66
    %p73 = scmp.eq.s32.totalorder %s14, 1
    %p74 = por %p72, %p73
    %p75 = scmp.ne.s32.totalorder %s66, %s67
    %p76 = scmp.eq.s32.totalorder %s14, 0
    %p77 = por %p75, %p76
    %p78 = scmp.ne.s32.totalorder %s66, %s67
    %p79 = scmp.eq.s32.totalorder %s15, 1
    %p80 = por %p78, %p79
    %p82 = scmp.ne.s32.totalorder %s67, %s81
    %p83 = scmp.eq.s32.totalorder %s15, 0
    %p84 = por %p82, %p83
    %s85 = ssub.s32 %s9, %s16
    %p86 = scmp.eq.s32.totalorder %s85, 0
    %s88 = sadd.s32 %s87, 1
    %s89 = scalar_select %p86, %s87, %s88
    %p92 = pneg %p86
    %p93 = scmp.eq.s32.totalorder %s9, 1
    %p94 = por %p92, %p93
    %p95 = scmp.ne.s32.totalorder %s87, %s90
    %p96 = scmp.eq.s32.totalorder %s9, 0
    %p97 = por %p95, %p96
    %p98 = scmp.ne.s32.totalorder %s87, %s90
    %p99 = scmp.eq.s32.totalorder %s14, 1
    %p100 = por %p98, %p99
    %p101 = scmp.ne.s32.totalorder %s90, %s91
    %p102 = scmp.eq.s32.totalorder %s14, 0
    %p103 = por %p101, %p102
    %p104 = scmp.ne.s32.totalorder %s90, %s91
    %p105 = scmp.eq.s32.totalorder %s15, 1
    %p106 = por %p104, %p105
    %p108 = scmp.ne.s32.totalorder %s91, %s107
    %p109 = scmp.eq.s32.totalorder %s15, 0
    %p110 = por %p108, %p109
    %p111 = scmp.le.s32.totalorder 1, %s9
    %p112 = scmp.lt.s32.totalorder %s9, 3
    %p113 = pnand %p111, %p112
    %p114 = pneg %p113
    // Predicated region
    $region9: #{upsample_forward.1} parent=5 // pred_check
      _
    $region10: #{upsample_forward.1} parent=5 // pred_check_branch
      %116 = sbr.rel (%p113) target = $region12
    $region11: #{upsample_forward.1} parent=5 // pred_region
      %s117 = ssub.s32 %s9, 1
      // Predicated region
      $region13: #{upsample_forward.1} parent=11 // pred_check
        %p118 = pneg %p56
      $region14: #{upsample_forward.1} parent=11 // pred_check_branch
        %120 = sbr.rel (%p118) target = $region16
      $region15: #{upsample_forward.1} parent=11 // pred_region
        _
      $region16: #{upsample_forward.1} parent=11 // pred_fallthru
        _
      // Predicated region
      $region17: #{upsample_forward.1} parent=11 // pred_check
        %p121 = pneg %p77
      $region18: #{upsample_forward.1} parent=11 // pred_check_branch
        %123 = sbr.rel (%p121) target = $region20
      $region19: #{upsample_forward.1} parent=11 // pred_region
        _
      $region20: #{upsample_forward.1} parent=11 // pred_fallthru
        _
    $region12: #{upsample_forward.1} parent=5 // pred_fallthru
      _
    %p124 = scmp.lt.s32.totalorder %s9, 2
    // Predicated region
    $region21: #{upsample_forward.1} parent=5 // pred_check
      %p125 = pneg %p124
    $region22: #{upsample_forward.1} parent=5 // pred_check_branch
      %127 = sbr.rel (%p125) target = $region24
    $region23: #{upsample_forward.1} parent=5 // pred_region
      // Predicated region
      $region25: #{upsample_forward.1} parent=23 // pred_check
        %p128 = pneg %p29
      $region26: #{upsample_forward.1} parent=23 // pred_check_branch
        %130 = sbr.rel (%p128) target = $region28
      $region27: #{upsample_forward.1} parent=23 // pred_region
        %p131 = scmp.lt.s32.totalorder %s9, 1
        %s132 = scalar_select %p131, %s9, 1
        %s133 = smul.addr %s132, 32
        %s134 = smul.addr %s133, 8
        %s135 = scalar_lea.vmem %s0, %s134
      $region28: #{upsample_forward.1} parent=23 // pred_fallthru
        _
    $region24: #{upsample_forward.1} parent=5 // pred_fallthru
      _
    %p136 = scmp.le.s32.totalorder 1, %s9
    %p137 = scmp.lt.s32.totalorder %s9, 3
    %p138 = pnand %p136, %p137
    %p139 = pneg %p138
    // Predicated region
    $region29: #{upsample_forward.1} parent=5 // pred_check
      _
    $region30: #{upsample_forward.1} parent=5 // pred_check_branch
      %141 = sbr.rel (%p138) target = $region32
    $region31: #{upsample_forward.1} parent=5 // pred_region
      %s142 = ssub.s32 %s9, 1
      %p143 = scmp.lt.s32.totalorder %s14, 1
      %s144 = scalar_select %p143, %s14, 1
      %s145 = smul.addr %s144, 32
      %s146 = smul.addr %s145, 8
      %s147 = scalar_lea.vmem %s0, %s146
      %p148 = pneg %p35
      %p149 = pneg %p32
      %p150 = pneg %p56
      %p151 = pneg %p53
      %p152 = pneg %p77
      %p153 = pneg %p74
      %p154 = pneg %p103
      %p155 = pneg %p100
      %p156 = scmp.lt.s32.totalorder %s14, 1
      %s157 = scalar_select %p156, %s14, 1
      %s158 = smul.addr %s157, 51
      %s159 = smul.addr %s158, 8
      %s160 = scalar_lea.vmem %s3, %s159
      %p161 = scmp.lt.s32.totalorder %s14, 1
      %s162 = scalar_select %p161, %s14, 1
      %s163 = smul.addr %s162, 32
      %s164 = smul.addr %s163, 8
      %s165 = scalar_lea.vmem %s0, %s164
      %p166 = scmp.lt.s32.totalorder %s14, 1
      %s167 = scalar_select %p166, %s14, 1
      %s168 = smul.addr %s167, 51
      %s169 = smul.addr %s168, 8
      %s170 = scalar_lea.vmem %s3, %s169
      %v171 = vld [vmem:[%s165] sm:$0xff]
      %v172 = vld [vmem:[%s165 + $0x8] sm:$0xff]
      %v173 = vld [vmem:[%s165 + $0x10] sm:$0xff]
      %v174 = vld [vmem:[%s165 + $0x18] sm:$0xff]
      %v175 = vld [vmem:[%s165 + $0x20] sm:$0xff]
      %v176 = vld [vmem:[%s165 + $0x28] sm:$0xff]
      %v177 = vld [vmem:[%s165 + $0x30] sm:$0xff]
      %v178 = vld [vmem:[%s165 + $0x38] sm:$0xff]
      %v179 = vld [vmem:[%s165 + $0x40] sm:$0xff]
      %v180 = vld [vmem:[%s165 + $0x48] sm:$0xff]
      %v181 = vld [vmem:[%s165 + $0x50] sm:$0xff]
      %v182 = vld [vmem:[%s165 + $0x58] sm:$0xff]
      %v183 = vld [vmem:[%s165 + $0x60] sm:$0xff]
      %v184 = vld [vmem:[%s165 + $0x68] sm:$0xff]
      %v185 = vld [vmem:[%s165 + $0x70] sm:$0xff]
      %v186 = vld [vmem:[%s165 + $0x78] sm:$0xff]
      %v187 = vld [vmem:[%s165 + $0x80] sm:$0xff]
      %v188 = vld [vmem:[%s165 + $0x88] sm:$0xff]
      %v189 = vld [vmem:[%s165 + $0x90] sm:$0xff]
      %v190 = vld [vmem:[%s165 + $0x98] sm:$0xff]
      %v191 = vld [vmem:[%s165 + $0xa0] sm:$0xff]
      %v192 = vld [vmem:[%s165 + $0xa8] sm:$0xff]
      %v193 = vld [vmem:[%s165 + $0xb0] sm:$0xff]
      %v194 = vld [vmem:[%s165 + $0xb8] sm:$0xff]
      %v195 = vld [vmem:[%s165 + $0xc0] sm:$0xff]
      %v196 = vld [vmem:[%s165 + $0xc8] sm:$0xff]
      %v197 = vld [vmem:[%s165 + $0xd0] sm:$0xff]
      %v198 = vld [vmem:[%s165 + $0xd8] sm:$0xff]
      %v199 = vld [vmem:[%s165 + $0xe0] sm:$0xff]
      %v200 = vld [vmem:[%s165 + $0xe8] sm:$0xff]
      %v201 = vld [vmem:[%s165 + $0xf0] sm:$0xff]
      %v202 = vld [vmem:[%s165 + $0xf8] sm:$0xff]
      %v203 = vld [vmem:[%s1] sm:$0xf]
      %vm204 = vcmask 31744
      %v206 = vsel %vm204, %v171, 0
      %v209 = vsel %vm204, %v172, 0
      %v212 = vsel %vm204, %v173, 0
      %v215 = vsel %vm204, %v174, 0
      %v218 = vsel %vm204, %v175, 0
      %v221 = vsel %vm204, %v176, 0
      %v224 = vsel %vm204, %v177, 0
      %v227 = vsel %vm204, %v178, 0
      %v230 = vsel %vm204, %v179, 0
      %v233 = vsel %vm204, %v180, 0
      %v236 = vsel %vm204, %v181, 0
      %v239 = vsel %vm204, %v182, 0
      %v242 = vsel %vm204, %v183, 0
      %v245 = vsel %vm204, %v184, 0
      %v248 = vsel %vm204, %v185, 0
      %v251 = vsel %vm204, %v186, 0
      %v254 = vsel %vm204, %v187, 0
      %v257 = vsel %vm204, %v188, 0
      %v260 = vsel %vm204, %v189, 0
      %v263 = vsel %vm204, %v190, 0
      %v266 = vsel %vm204, %v191, 0
      %v269 = vsel %vm204, %v192, 0
      %v272 = vsel %vm204, %v193, 0
      %v275 = vsel %vm204, %v194, 0
      %v278 = vsel %vm204, %v195, 0
      %v281 = vsel %vm204, %v196, 0
      %v284 = vsel %vm204, %v197, 0
      %v287 = vsel %vm204, %v198, 0
      %v290 = vsel %vm204, %v199, 0
      %v293 = vsel %vm204, %v200, 0
      %v296 = vsel %vm204, %v201, 0
      %v299 = vsel %vm204, %v202, 0
      %vm301 = vcmask 1043456
      %v303 = vsel %vm301, %v203, 0
      %305 = vmatprep.subr.mxu0 0.0
      %306 = vmatpush1.msra.mxu0 %v303
      %307 = vmatprep.subr.mxu0 0.0
      %308 = vmatpush1.msra.mxu0 0.0
      %309 = vmatprep.subr.mxu0 0.0
      %310 = vmatpush1.msra.mxu0 0.0
      %311 = vmatprep.subr.mxu0 0.0
      %312 = vmatpush1.msra.mxu0 0.0
      %313 = vmatprep.subr.mxu0 0.0
      %314 = vmatpush1.msra.mxu0 0.0
      %315 = vmatprep.subr.mxu0 0.0
      %316 = vmatpush1.msra.mxu0 0.0
      %317 = vmatprep.subr.mxu0 0.0
      %318 = vmatpush1.msra.mxu0 0.0
      %319 = vmatprep.subr.mxu0 0.0
      %320 = vmatpush1.msra.mxu0 0.0
      %321 = vmatprep.subr.mxu0 0.0
      %322 = vmatpush1.msra.mxu0 0.0
      %323 = vmatprep.subr.mxu0 0.0
      %324 = vmatpush1.msra.mxu0 0.0
      %325 = vmatprep.subr.mxu0 0.0
      %326 = vmatpush1.msra.mxu0 0.0
      %327 = vmatprep.subr.mxu0 0.0
      %328 = vmatpush1.msra.mxu0 0.0
      %329 = vmatprep.subr.mxu0 0.0
      %330 = vmatpush1.msra.mxu0 0.0
      %331 = vmatprep.subr.mxu0 0.0
      %332 = vmatpush1.msra.mxu0 0.0
      %333 = vmatprep.subr.mxu0 0.0
      %334 = vmatpush1.msra.mxu0 0.0
      %335 = vmatprep.subr.mxu0 0.0
      %336 = vmatpush1.msra.mxu0 0.0
      %337 = vmatprep.subr.mxu0 0.0
      %338 = vmatpush1.msra.mxu0 0.0
      %339 = vmatprep.subr.mxu0 0.0
      %340 = vmatpush1.msra.mxu0 0.0
      %341 = vmatprep.subr.mxu0 0.0
      %342 = vmatpush1.msra.mxu0 0.0
      %343 = vmatprep.subr.mxu0 0.0
      %344 = vmatpush1.msra.mxu0 0.0
      %345 = vmatprep.subr.mxu0 0.0
      %346 = vmatpush1.msra.mxu0 0.0
      %347 = vmatprep.subr.mxu0 0.0
      %348 = vmatpush1.msra.mxu0 0.0
      %349 = vmatprep.subr.mxu0 0.0
      %350 = vmatpush1.msra.mxu0 0.0
      %351 = vmatprep.subr.mxu0 0.0
      %352 = vmatpush1.msra.mxu0 0.0
      %353 = vmatprep.subr.mxu0 0.0
      %354 = vmatpush1.msra.mxu0 0.0
      %355 = vmatprep.subr.mxu0 0.0
      %356 = vmatpush1.msra.mxu0 0.0
      %357 = vmatprep.subr.mxu0 0.0
      %358 = vmatpush1.msra.mxu0 0.0
      %359 = vmatprep.subr.mxu0 0.0
      %360 = vmatpush1.msra.mxu0 0.0
      %361 = vmatprep.subr.mxu0 0.0
      %362 = vmatpush1.msra.mxu0 0.0
      %363 = vmatprep.subr.mxu0 0.0
      %364 = vmatpush1.msra.mxu0 0.0
      %365 = vmatprep.subr.mxu0 0.0
      %366 = vmatpush1.msra.mxu0 0.0
      %367 = vmatprep.subr.mxu0 0.0
      %368 = vmatpush1.msra.mxu0 0.0
      %369 = vmatprep.mubr.f32.mxu0 0.0
      %370 = vmatmul.mubr.f32.gmra.mrb[0].mxu0 %v206
      %v371 = vpop.f32.mrb[0].mxu0
      %v372 = vadd.f32 0.0, %v371
      %v373 = vpop.f32.mrb[0].mxu0
      %374 = vmatprep.mubr.f32.mxu0 0.0
      %375 = vmatmul.mubr.f32.gmra.mrb[0].mxu0 %v209
      %v376 = vpop.f32.mrb[0].mxu0
      %v377 = vadd.f32 0.0, %v376
      %v378 = vpop.f32.mrb[0].mxu0
      %379 = vmatprep.mubr.f32.mxu0 0.0
      %380 = vmatmul.mubr.f32.gmra.mrb[0].mxu0 %v212
      %v381 = vpop.f32.mrb[0].mxu0
      %v382 = vadd.f32 0.0, %v381
      %v383 = vpop.f32.mrb[0].mxu0
      %384 = vmatprep.mubr.f32.mxu0 0.0
      %385 = vmatmul.mubr.f32.gmra.mrb[0].mxu0 %v215
      %v386 = vpop.f32.mrb[0].mxu0
      %v387 = vadd.f32 0.0, %v386
      %v388 = vpop.f32.mrb[0].mxu0
      %389 = vmatprep.mubr.f32.mxu0 0.0
      %390 = vmatmul.mubr.f32.gmra.mrb[0].mxu0 %v218
      %v391 = vpop.f32.mrb[0].mxu0
      %v392 = vadd.f32 0.0, %v391
      %v393 = vpop.f32.mrb[0].mxu0
      %394 = vmatprep.mubr.f32.mxu0 0.0
      %395 = vmatmul.mubr.f32.gmra.mrb[0].mxu0 %v221
      %v396 = vpop.f32.mrb[0].mxu0
      %v397 = vadd.f32 0.0, %v396
      %v398 = vpop.f32.mrb[0].mxu0
      %399 = vmatprep.mubr.f32.mxu0 0.0
      %400 = vmatmul.mubr.f32.gmra.mrb[0].mxu0 %v224
      %v401 = vpop.f32.mrb[0].mxu0
      %v402 = vadd.f32 0.0, %v401
      %v403 = vpop.f32.mrb[0].mxu0
      %404 = vmatprep.mubr.f32.mxu0 0.0
      %405 = vmatmul.mubr.f32.gmra.mrb[0].mxu0 %v227
      %v406 = vpop.f32.mrb[0].mxu0
      %v407 = vadd.f32 0.0, %v406
      %v408 = vpop.f32.mrb[0].mxu0
      %409 = vmatprep.mubr.f32.mxu0 0.0
      %410 = vmatmul.mubr.f32.gmra.mrb[0].mxu0 %v230
      %v411 = vpop.f32.mrb[0].mxu0
      %v412 = vadd.f32 0.0, %v411
      %v413 = vpop.f32.mrb[0].mxu0
      %414 = vmatprep.mubr.f32.mxu0 0.0
      %415 = vmatmul.mubr.f32.gmra.mrb[0].mxu0 %v233
      %v416 = vpop.f32.mrb[0].mxu0
      %v417 = vadd.f32 0.0, %v416
      %v418 = vpop.f32.mrb[0].mxu0
      %419 = vmatprep.mubr.f32.mxu0 0.0
      %420 = vmatmul.mubr.f32.gmra.mrb[0].mxu0 %v236
      %v421 = vpop.f32.mrb[0].mxu0
      %v422 = vadd.f32 0.0, %v421
      %v423 = vpop.f32.mrb[0].mxu0
      %424 = vmatprep.mubr.f32.mxu0 0.0
      %425 = vmatmul.mubr.f32.gmra.mrb[0].mxu0 %v239
      %v426 = vpop.f32.mrb[0].mxu0
      %v427 = vadd.f32 0.0, %v426
      %v428 = vpop.f32.mrb[0].mxu0
      %429 = vmatprep.mubr.f32.mxu0 0.0
      %430 = vmatmul.mubr.f32.gmra.mrb[0].mxu0 %v242
      %v431 = vpop.f32.mrb[0].mxu0
      %v432 = vadd.f32 0.0, %v431
      %v433 = vpop.f32.mrb[0].mxu0
      %434 = vmatprep.mubr.f32.mxu0 0.0
      %435 = vmatmul.mubr.f32.gmra.mrb[0].mxu0 %v245
      %v436 = vpop.f32.mrb[0].mxu0
      %v437 = vadd.f32 0.0, %v436
      %v438 = vpop.f32.mrb[0].mxu0
      %439 = vmatprep.mubr.f32.mxu0 0.0
      %440 = vmatmul.mubr.f32.gmra.mrb[0].mxu0 %v248
      %v441 = vpop.f32.mrb[0].mxu0
      %v442 = vadd.f32 0.0, %v441
      %v443 = vpop.f32.mrb[0].mxu0
      %444 = vmatprep.mubr.f32.mxu0 0.0
      %445 = vmatmul.mubr.f32.gmra.mrb[0].mxu0 %v251
      %v446 = vpop.f32.mrb[0].mxu0
      %v447 = vadd.f32 0.0, %v446
      %v448 = vpop.f32.mrb[0].mxu0
      %449 = vmatprep.mubr.f32.mxu0 0.0
      %450 = vmatmul.mubr.f32.gmra.mrb[0].mxu0 %v254
      %v451 = vpop.f32.mrb[0].mxu0
      %v452 = vadd.f32 0.0, %v451
      %v453 = vpop.f32.mrb[0].mxu0
      %454 = vmatprep.mubr.f32.mxu0 0.0
      %455 = vmatmul.mubr.f32.gmra.mrb[0].mxu0 %v257
      %v456 = vpop.f32.mrb[0].mxu0
      %v457 = vadd.f32 0.0, %v456
      %v458 = vpop.f32.mrb[0].mxu0
      %459 = vmatprep.mubr.f32.mxu0 0.0
      %460 = vmatmul.mubr.f32.gmra.mrb[0].mxu0 %v260
      %v461 = vpop.f32.mrb[0].mxu0
      %v462 = vadd.f32 0.0, %v461
      %v463 = vpop.f32.mrb[0].mxu0
      %464 = vmatprep.mubr.f32.mxu0 0.0
      %465 = vmatmul.mubr.f32.gmra.mrb[0].mxu0 %v263
      %v466 = vpop.f32.mrb[0].mxu0
      %v467 = vadd.f32 0.0, %v466
      %v468 = vpop.f32.mrb[0].mxu0
      %469 = vmatprep.mubr.f32.mxu0 0.0
      %470 = vmatmul.mubr.f32.gmra.mrb[0].mxu0 %v266
      %v471 = vpop.f32.mrb[0].mxu0
      %v472 = vadd.f32 0.0, %v471
      %v473 = vpop.f32.mrb[0].mxu0
      %474 = vmatprep.mubr.f32.mxu0 0.0
      %475 = vmatmul.mubr.f32.gmra.mrb[0].mxu0 %v269
      %v476 = vpop.f32.mrb[0].mxu0
      %v477 = vadd.f32 0.0, %v476
      %v478 = vpop.f32.mrb[0].mxu0
      %479 = vmatprep.mubr.f32.mxu0 0.0
      %480 = vmatmul.mubr.f32.gmra.mrb[0].mxu0 %v272
      %v481 = vpop.f32.mrb[0].mxu0
      %v482 = vadd.f32 0.0, %v481
      %v483 = vpop.f32.mrb[0].mxu0
      %484 = vmatprep.mubr.f32.mxu0 0.0
      %485 = vmatmul.mubr.f32.gmra.mrb[0].mxu0 %v275
      %v486 = vpop.f32.mrb[0].mxu0
      %v487 = vadd.f32 0.0, %v486
      %v488 = vpop.f32.mrb[0].mxu0
      %489 = vmatprep.mubr.f32.mxu0 0.0
      %490 = vmatmul.mubr.f32.gmra.mrb[0].mxu0 %v278
      %v491 = vpop.f32.mrb[0].mxu0
      %v492 = vadd.f32 0.0, %v491
      %v493 = vpop.f32.mrb[0].mxu0
      %494 = vmatprep.mubr.f32.mxu0 0.0
      %495 = vmatmul.mubr.f32.gmra.mrb[0].mxu0 %v281
      %v496 = vpop.f32.mrb[0].mxu0
      %v497 = vadd.f32 0.0, %v496
      %v498 = vpop.f32.mrb[0].mxu0
      %499 = vmatprep.mubr.f32.mxu0 0.0
      %500 = vmatmul.mubr.f32.gmra.mrb[0].mxu0 %v284
      %v501 = vpop.f32.mrb[0].mxu0
      %v502 = vadd.f32 0.0, %v501
      %v503 = vpop.f32.mrb[0].mxu0
      %504 = vmatprep.mubr.f32.mxu0 0.0
      %505 = vmatmul.mubr.f32.gmra.mrb[0].mxu0 %v287
      %v506 = vpop.f32.mrb[0].mxu0
      %v507 = vadd.f32 0.0, %v506
      %v508 = vpop.f32.mrb[0].mxu0
      %509 = vmatprep.mubr.f32.mxu0 0.0
      %510 = vmatmul.mubr.f32.gmra.mrb[0].mxu0 %v290
      %v511 = vpop.f32.mrb[0].mxu0
      %v512 = vadd.f32 0.0, %v511
      %v513 = vpop.f32.mrb[0].mxu0
      %514 = vmatprep.mubr.f32.mxu0 0.0
      %515 = vmatmul.mubr.f32.gmra.mrb[0].mxu0 %v293
      %v516 = vpop.f32.mrb[0].mxu0
      %v517 = vadd.f32 0.0, %v516
      %v518 = vpop.f32.mrb[0].mxu0
      %519 = vmatprep.mubr.f32.mxu0 0.0
      %520 = vmatmul.mubr.f32.gmra.mrb[0].mxu0 %v296
      %v521 = vpop.f32.mrb[0].mxu0
      %v522 = vadd.f32 0.0, %v521
      %v523 = vpop.f32.mrb[0].mxu0
      %524 = vmatprep.mubr.f32.mxu0 0.0
      %525 = vmatmul.mubr.f32.gmra.mrb[0].mxu0 %v299
      %v526 = vpop.f32.mrb[0].mxu0
      %v527 = vadd.f32 0.0, %v526
      %v528 = vpop.f32.mrb[0].mxu0
      %529 = vdwg.mxu0
      %vm530 = vcmask 261120
      %531 = vst.msk [vmem:[#allocation2] sm:$0xff] %vm530, 0.0
      %532 = vst.msk [vmem:[#allocation2 + $0x8] sm:$0xff] %vm530, 0.0
      %vm533 = vcmask 253952
      %534 = vst.msk [vmem:[#allocation2 + $0x10] sm:$0x1] %vm533, 0.0
      %535 = vst.msk [vmem:[#allocation2 + $0x18] sm:$0xff] %vm530, 0.0
      %536 = vst.msk [vmem:[#allocation2 + $0x20] sm:$0xff] %vm530, 0.0
      %537 = vst.msk [vmem:[#allocation2 + $0x28] sm:$0x1] %vm533, 0.0
      %538 = vst.msk [vmem:[#allocation2 + $0x30] sm:$0xff] %vm530, 0.0
      %539 = vst.msk [vmem:[#allocation2 + $0x38] sm:$0xff] %vm530, 0.0
      %540 = vst.msk [vmem:[#allocation2 + $0x40] sm:$0x1] %vm533, 0.0
      %541 = vst.msk [vmem:[#allocation2 + $0x48] sm:$0xff] %vm530, 0.0
      %542 = vst.msk [vmem:[#allocation2 + $0x50] sm:$0xff] %vm530, 0.0
      %543 = vst.msk [vmem:[#allocation2 + $0x58] sm:$0x1] %vm533, 0.0
      %544 = vst.msk [vmem:[#allocation2 + $0x60] sm:$0xff] %vm530, 0.0
      %545 = vst.msk [vmem:[#allocation2 + $0x68] sm:$0xff] %vm530, 0.0
      %546 = vst.msk [vmem:[#allocation2 + $0x70] sm:$0x1] %vm533, 0.0
      %547 = vst.msk [vmem:[#allocation2 + $0x78] sm:$0xff] %vm530, 0.0
      %548 = vst.msk [vmem:[#allocation2 + $0x80] sm:$0xff] %vm530, 0.0
      %549 = vst.msk [vmem:[#allocation2 + $0x88] sm:$0x1] %vm533, 0.0
      %550 = vst.msk [vmem:[#allocation2 + $0x90] sm:$0xff] %vm530, 0.0
      %551 = vst.msk [vmem:[#allocation2 + $0x98] sm:$0xff] %vm530, 0.0
      %552 = vst.msk [vmem:[#allocation2 + $0xa0] sm:$0x1] %vm533, 0.0
      %553 = vst.msk [vmem:[#allocation2 + $0xa8] sm:$0xff] %vm530, 0.0
      %554 = vst.msk [vmem:[#allocation2 + $0xb0] sm:$0xff] %vm530, 0.0
      %555 = vst.msk [vmem:[#allocation2 + $0xb8] sm:$0x1] %vm533, 0.0
      %556 = vst.msk [vmem:[#allocation2 + $0xc0] sm:$0xff] %vm530, 0.0
      %557 = vst.msk [vmem:[#allocation2 + $0xc8] sm:$0xff] %vm530, 0.0
      %558 = vst.msk [vmem:[#allocation2 + $0xd0] sm:$0x1] %vm533, 0.0
      %559 = vst.msk [vmem:[#allocation2 + $0xd8] sm:$0xff] %vm530, 0.0
      %560 = vst.msk [vmem:[#allocation2 + $0xe0] sm:$0xff] %vm530, 0.0
      %561 = vst.msk [vmem:[#allocation2 + $0xe8] sm:$0x1] %vm533, 0.0
      %562 = vst.msk [vmem:[#allocation2 + $0xf0] sm:$0xff] %vm530, 0.0
      %563 = vst.msk [vmem:[#allocation2 + $0xf8] sm:$0xff] %vm530, 0.0
      %564 = vst.msk [vmem:[#allocation2 + $0x100] sm:$0x1] %vm533, 0.0
      %565 = vst.msk [vmem:[#allocation2 + $0x108] sm:$0xff] %vm530, 0.0
      %566 = vst.msk [vmem:[#allocation2 + $0x110] sm:$0xff] %vm530, 0.0
      %567 = vst.msk [vmem:[#allocation2 + $0x118] sm:$0x1] %vm533, 0.0
      %568 = vst.msk [vmem:[#allocation2 + $0x120] sm:$0xff] %vm530, 0.0
      %569 = vst.msk [vmem:[#allocation2 + $0x128] sm:$0xff] %vm530, 0.0
      %570 = vst.msk [vmem:[#allocation2 + $0x130] sm:$0x1] %vm533, 0.0
      %571 = vst.msk [vmem:[#allocation2 + $0x138] sm:$0xff] %vm530, 0.0
      %572 = vst.msk [vmem:[#allocation2 + $0x140] sm:$0xff] %vm530, 0.0
      %573 = vst.msk [vmem:[#allocation2 + $0x148] sm:$0x1] %vm533, 0.0
      %574 = vst.msk [vmem:[#allocation2 + $0x150] sm:$0xff] %vm530, 0.0
      %575 = vst.msk [vmem:[#allocation2 + $0x158] sm:$0xff] %vm530, 0.0
      %576 = vst.msk [vmem:[#allocation2 + $0x160] sm:$0x1] %vm533, 0.0
      %577 = vst.msk [vmem:[#allocation2 + $0x168] sm:$0xff] %vm530, 0.0
      %578 = vst.msk [vmem:[#allocation2 + $0x170] sm:$0xff] %vm530, 0.0
      %579 = vst.msk [vmem:[#allocation2 + $0x178] sm:$0x1] %vm533, 0.0
      %580 = vst.msk [vmem:[#allocation2 + $0x180] sm:$0xff] %vm530, 0.0
      %581 = vst.msk [vmem:[#allocation2 + $0x188] sm:$0xff] %vm530, 0.0
      %582 = vst.msk [vmem:[#allocation2 + $0x190] sm:$0x1] %vm533, 0.0
      %v583 = vld [vmem:[#allocation2] sm:$0xff]
      %v584 = vld [vmem:[#allocation2 + $0x8] sm:$0xff]
      %v585 = vld [vmem:[#allocation2 + $0x18] sm:$0xff]
      %v586 = vld [vmem:[#allocation2 + $0x20] sm:$0xff]
      %v587 = vld [vmem:[#allocation2 + $0x30] sm:$0xff]
      %v588 = vld [vmem:[#allocation2 + $0x38] sm:$0xff]
      %v589 = vld [vmem:[#allocation2 + $0x48] sm:$0xff]
      %v590 = vld [vmem:[#allocation2 + $0x50] sm:$0xff]
      %v591 = vld [vmem:[#allocation2 + $0x60] sm:$0xff]
      %v592 = vld [vmem:[#allocation2 + $0x68] sm:$0xff]
      %v593 = vld [vmem:[#allocation2 + $0x78] sm:$0xff]
      %v594 = vld [vmem:[#allocation2 + $0x80] sm:$0xff]
      %v595 = vld [vmem:[#allocation2 + $0x90] sm:$0xff]
      %v596 = vld [vmem:[#allocation2 + $0x98] sm:$0xff]
      %v597 = vld [vmem:[#allocation2 + $0xa8] sm:$0xff]
      %v598 = vld [vmem:[#allocation2 + $0xb0] sm:$0xff]
      %v599 = vld [vmem:[#allocation2 + $0xc0] sm:$0xff]
      %v600 = vld [vmem:[#allocation2 + $0xc8] sm:$0xff]
      %v601 = vld [vmem:[#allocation2 + $0xd8] sm:$0xff]
      %v602 = vld [vmem:[#allocation2 + $0xe0] sm:$0xff]
      %v603 = vld [vmem:[#allocation2 + $0xf0] sm:$0xff]
      %v604 = vld [vmem:[#allocation2 + $0xf8] sm:$0xff]
      %v605 = vld [vmem:[#allocation2 + $0x108] sm:$0xff]
      %v606 = vld [vmem:[#allocation2 + $0x110] sm:$0xff]
      %v607 = vld [vmem:[#allocation2 + $0x120] sm:$0xff]
      %v608 = vld [vmem:[#allocation2 + $0x128] sm:$0xff]
      %v609 = vld [vmem:[#allocation2 + $0x138] sm:$0xff]
      %v610 = vld [vmem:[#allocation2 + $0x140] sm:$0xff]
      %v611 = vld [vmem:[#allocation2 + $0x150] sm:$0xff]
      %v612 = vld [vmem:[#allocation2 + $0x158] sm:$0xff]
      %v613 = vld [vmem:[#allocation2 + $0x168] sm:$0xff]
      %v614 = vld [vmem:[#allocation2 + $0x170] sm:$0xff]
      %v615 = vadd.f32 %v583, %v372
      %v616 = vadd.f32 %v584, %v377
      %v617 = vadd.f32 %v585, %v382
      %v618 = vadd.f32 %v586, %v387
      %v619 = vadd.f32 %v587, %v392
      %v620 = vadd.f32 %v588, %v397
      %v621 = vadd.f32 %v589, %v402
      %v622 = vadd.f32 %v590, %v407
      %v623 = vadd.f32 %v591, %v412
      %v624 = vadd.f32 %v592, %v417
      %v625 = vadd.f32 %v593, %v422
      %v626 = vadd.f32 %v594, %v427
      %v627 = vadd.f32 %v595, %v432
      %v628 = vadd.f32 %v596, %v437
      %v629 = vadd.f32 %v597, %v442
      %v630 = vadd.f32 %v598, %v447
      %v631 = vadd.f32 %v599, %v452
      %v632 = vadd.f32 %v600, %v457
      %v633 = vadd.f32 %v601, %v462
      %v634 = vadd.f32 %v602, %v467
      %v635 = vadd.f32 %v603, %v472
      %v636 = vadd.f32 %v604, %v477
      %v637 = vadd.f32 %v605, %v482
      %v638 = vadd.f32 %v606, %v487
      %v639 = vadd.f32 %v607, %v492
      %v640 = vadd.f32 %v608, %v497
      %v641 = vadd.f32 %v609, %v502
      %v642 = vadd.f32 %v610, %v507
      %v643 = vadd.f32 %v611, %v512
      %v644 = vadd.f32 %v612, %v517
      %v645 = vadd.f32 %v613, %v522
      %v646 = vadd.f32 %v614, %v527
      %647 = vst.msk [vmem:[#allocation2] sm:$0xff] %vm530, %v615
      %648 = vst.msk [vmem:[#allocation2 + $0x8] sm:$0xff] %vm530, %v616
      %649 = vst.msk [vmem:[#allocation2 + $0x18] sm:$0xff] %vm530, %v617
      %650 = vst.msk [vmem:[#allocation2 + $0x20] sm:$0xff] %vm530, %v618
      %651 = vst.msk [vmem:[#allocation2 + $0x30] sm:$0xff] %vm530, %v619
      %652 = vst.msk [vmem:[#allocation2 + $0x38] sm:$0xff] %vm530, %v620
      %653 = vst.msk [vmem:[#allocation2 + $0x48] sm:$0xff] %vm530, %v621
      %654 = vst.msk [vmem:[#allocation2 + $0x50] sm:$0xff] %vm530, %v622
      %655 = vst.msk [vmem:[#allocation2 + $0x60] sm:$0xff] %vm530, %v623
      %656 = vst.msk [vmem:[#allocation2 + $0x68] sm:$0xff] %vm530, %v624
      %657 = vst.msk [vmem:[#allocation2 + $0x78] sm:$0xff] %vm530, %v625
      %658 = vst.msk [vmem:[#allocation2 + $0x80] sm:$0xff] %vm530, %v626
      %659 = vst.msk [vmem:[#allocation2 + $0x90] sm:$0xff] %vm530, %v627
      %660 = vst.msk [vmem:[#allocation2 + $0x98] sm:$0xff] %vm530, %v628
      %661 = vst.msk [vmem:[#allocation2 + $0xa8] sm:$0xff] %vm530, %v629
      %662 = vst.msk [vmem:[#allocation2 + $0xb0] sm:$0xff] %vm530, %v630
      %663 = vst.msk [vmem:[#allocation2 + $0xc0] sm:$0xff] %vm530, %v631
      %664 = vst.msk [vmem:[#allocation2 + $0xc8] sm:$0xff] %vm530, %v632
      %665 = vst.msk [vmem:[#allocation2 + $0xd8] sm:$0xff] %vm530, %v633
      %666 = vst.msk [vmem:[#allocation2 + $0xe0] sm:$0xff] %vm530, %v634
      %667 = vst.msk [vmem:[#allocation2 + $0xf0] sm:$0xff] %vm530, %v635
      %668 = vst.msk [vmem:[#allocation2 + $0xf8] sm:$0xff] %vm530, %v636
      %669 = vst.msk [vmem:[#allocation2 + $0x108] sm:$0xff] %vm530, %v637
      %670 = vst.msk [vmem:[#allocation2 + $0x110] sm:$0xff] %vm530, %v638
      %671 = vst.msk [vmem:[#allocation2 + $0x120] sm:$0xff] %vm530, %v639
      %672 = vst.msk [vmem:[#allocation2 + $0x128] sm:$0xff] %vm530, %v640
      %673 = vst.msk [vmem:[#allocation2 + $0x138] sm:$0xff] %vm530, %v641
      %674 = vst.msk [vmem:[#allocation2 + $0x140] sm:$0xff] %vm530, %v642
      %675 = vst.msk [vmem:[#allocation2 + $0x150] sm:$0xff] %vm530, %v643
      %676 = vst.msk [vmem:[#allocation2 + $0x158] sm:$0xff] %vm530, %v644
      %677 = vst.msk [vmem:[#allocation2 + $0x168] sm:$0xff] %vm530, %v645
      %678 = vst.msk [vmem:[#allocation2 + $0x170] sm:$0xff] %vm530, %v646
      %v679 = vld [vmem:[#allocation2 + $0x1] sm:$0xff]
      %v680 = vld [vmem:[#allocation2 + $0x9] sm:$0xff]
      %v681 = vld [vmem:[#allocation2 + $0x19] sm:$0xff]
      %v682 = vld [vmem:[#allocation2 + $0x21] sm:$0xff]
      %v683 = vld [vmem:[#allocation2 + $0x31] sm:$0xff]
      %v684 = vld [vmem:[#allocation2 + $0x39] sm:$0xff]
      %v685 = vld [vmem:[#allocation2 + $0x49] sm:$0xff]
      %v686 = vld [vmem:[#allocation2 + $0x51] sm:$0xff]
      %v687 = vld [vmem:[#allocation2 + $0x61] sm:$0xff]
      %v688 = vld [vmem:[#allocation2 + $0x69] sm:$0xff]
      %v689 = vld [vmem:[#allocation2 + $0x79] sm:$0xff]
      %v690 = vld [vmem:[#allocation2 + $0x81] sm:$0xff]
      %v691 = vld [vmem:[#allocation2 + $0x91] sm:$0xff]
      %v692 = vld [vmem:[#allocation2 + $0x99] sm:$0xff]
      %v693 = vld [vmem:[#allocation2 + $0xa9] sm:$0xff]
      %v694 = vld [vmem:[#allocation2 + $0xb1] sm:$0xff]
      %v695 = vld [vmem:[#allocation2 + $0xc1] sm:$0xff]
      %v696 = vld [vmem:[#allocation2 + $0xc9] sm:$0xff]
      %v697 = vld [vmem:[#allocation2 + $0xd9] sm:$0xff]
      %v698 = vld [vmem:[#allocation2 + $0xe1] sm:$0xff]
      %v699 = vld [vmem:[#allocation2 + $0xf1] sm:$0xff]
      %v700 = vld [vmem:[#allocation2 + $0xf9] sm:$0xff]
      %v701 = vld [vmem:[#allocation2 + $0x109] sm:$0xff]
      %v702 = vld [vmem:[#allocation2 + $0x111] sm:$0xff]
      %v703 = vld [vmem:[#allocation2 + $0x121] sm:$0xff]
      %v704 = vld [vmem:[#allocation2 + $0x129] sm:$0xff]
      %v705 = vld [vmem:[#allocation2 + $0x139] sm:$0xff]
      %v706 = vld [vmem:[#allocation2 + $0x141] sm:$0xff]
      %v707 = vld [vmem:[#allocation2 + $0x151] sm:$0xff]
      %v708 = vld [vmem:[#allocation2 + $0x159] sm:$0xff]
      %v709 = vld [vmem:[#allocation2 + $0x169] sm:$0xff]
      %v710 = vld [vmem:[#allocation2 + $0x171] sm:$0xff]
      %743 = vrot.lane.b32.xlu0 %v372, 96
      %v744 = vpop.permute.xlu0 %743
      %745 = vrot.lane.b32.xlu0 %v377, 96
      %v746 = vpop.permute.xlu0 %745
      %747 = vrot.lane.b32.xlu0 %v382, 96
      %v748 = vpop.permute.xlu0 %747
      %749 = vrot.lane.b32.xlu0 %v387, 96
      %v750 = vpop.permute.xlu0 %749
      %751 = vrot.lane.b32.xlu0 %v392, 96
      %v752 = vpop.permute.xlu0 %751
      %753 = vrot.lane.b32.xlu0 %v397, 96
      %v754 = vpop.permute.xlu0 %753
      %755 = vrot.lane.b32.xlu0 %v402, 96
      %v756 = vpop.permute.xlu0 %755
      %757 = vrot.lane.b32.xlu0 %v407, 96
      %v758 = vpop.permute.xlu0 %757
      %759 = vrot.lane.b32.xlu0 %v412, 96
      %v760 = vpop.permute.xlu0 %759
      %761 = vrot.lane.b32.xlu0 %v417, 96
      %v762 = vpop.permute.xlu0 %761
      %763 = vrot.lane.b32.xlu0 %v422, 96
      %v764 = vpop.permute.xlu0 %763
      %765 = vrot.lane.b32.xlu0 %v427, 96
      %v766 = vpop.permute.xlu0 %765
      %767 = vrot.lane.b32.xlu0 %v432, 96
      %v768 = vpop.permute.xlu0 %767
      %769 = vrot.lane.b32.xlu0 %v437, 96
      %v770 = vpop.permute.xlu0 %769
      %771 = vrot.lane.b32.xlu0 %v442, 96
      %v772 = vpop.permute.xlu0 %771
      %773 = vrot.lane.b32.xlu0 %v447, 96
      %v774 = vpop.permute.xlu0 %773
      %775 = vrot.lane.b32.xlu0 %v452, 96
      %v776 = vpop.permute.xlu0 %775
      %777 = vrot.lane.b32.xlu0 %v457, 96
      %v778 = vpop.permute.xlu0 %777
      %779 = vrot.lane.b32.xlu0 %v462, 96
      %v780 = vpop.permute.xlu0 %779
      %781 = vrot.lane.b32.xlu0 %v467, 96
      %v782 = vpop.permute.xlu0 %781
      %783 = vrot.lane.b32.xlu0 %v472, 96
      %v784 = vpop.permute.xlu0 %783
      %785 = vrot.lane.b32.xlu0 %v477, 96
      %v786 = vpop.permute.xlu0 %785
      %787 = vrot.lane.b32.xlu0 %v482, 96
      %v788 = vpop.permute.xlu0 %787
      %789 = vrot.lane.b32.xlu0 %v487, 96
      %v790 = vpop.permute.xlu0 %789
      %791 = vrot.lane.b32.xlu0 %v492, 96
      %v792 = vpop.permute.xlu0 %791
      %793 = vrot.lane.b32.xlu0 %v497, 96
      %v794 = vpop.permute.xlu0 %793
      %795 = vrot.lane.b32.xlu0 %v502, 96
      %v796 = vpop.permute.xlu0 %795
      %797 = vrot.lane.b32.xlu0 %v507, 96
      %v798 = vpop.permute.xlu0 %797
      %799 = vrot.lane.b32.xlu0 %v512, 96
      %v800 = vpop.permute.xlu0 %799
      %801 = vrot.lane.b32.xlu0 %v517, 96
      %v802 = vpop.permute.xlu0 %801
      %803 = vrot.lane.b32.xlu0 %v522, 96
      %v804 = vpop.permute.xlu0 %803
      %805 = vrot.lane.b32.xlu0 %v527, 96
      %v806 = vpop.permute.xlu0 %805
      %v839 = vadd.f32 %v679, %v744
      %v840 = vadd.f32 %v680, %v746
      %v841 = vadd.f32 %v681, %v748
      %v842 = vadd.f32 %v682, %v750
      %v843 = vadd.f32 %v683, %v752
      %v844 = vadd.f32 %v684, %v754
      %v845 = vadd.f32 %v685, %v756
      %v846 = vadd.f32 %v686, %v758
      %v847 = vadd.f32 %v687, %v760
      %v848 = vadd.f32 %v688, %v762
      %v849 = vadd.f32 %v689, %v764
      %v850 = vadd.f32 %v690, %v766
      %v851 = vadd.f32 %v691, %v768
      %v852 = vadd.f32 %v692, %v770
      %v853 = vadd.f32 %v693, %v772
      %v854 = vadd.f32 %v694, %v774
      %v855 = vadd.f32 %v695, %v776
      %v856 = vadd.f32 %v696, %v778
      %v857 = vadd.f32 %v697, %v780
      %v858 = vadd.f32 %v698, %v782
      %v859 = vadd.f32 %v699, %v784
      %v860 = vadd.f32 %v700, %v786
      %v861 = vadd.f32 %v701, %v788
      %v862 = vadd.f32 %v702, %v790
      %v863 = vadd.f32 %v703, %v792
      %v864 = vadd.f32 %v704, %v794
      %v865 = vadd.f32 %v705, %v796
      %v866 = vadd.f32 %v706, %v798
      %v867 = vadd.f32 %v707, %v800
      %v868 = vadd.f32 %v708, %v802
      %v869 = vadd.f32 %v709, %v804
      %v870 = vadd.f32 %v710, %v806
      %871 = vst.msk [vmem:[#allocation2 + $0x1] sm:$0xff] %vm530, %v839
      %872 = vst.msk [vmem:[#allocation2 + $0x9] sm:$0xff] %vm530, %v840
      %873 = vst.msk [vmem:[#allocation2 + $0x19] sm:$0xff] %vm530, %v841
      %874 = vst.msk [vmem:[#allocation2 + $0x21] sm:$0xff] %vm530, %v842
      %875 = vst.msk [vmem:[#allocation2 + $0x31] sm:$0xff] %vm530, %v843
      %876 = vst.msk [vmem:[#allocation2 + $0x39] sm:$0xff] %vm530, %v844
      %877 = vst.msk [vmem:[#allocation2 + $0x49] sm:$0xff] %vm530, %v845
      %878 = vst.msk [vmem:[#allocation2 + $0x51] sm:$0xff] %vm530, %v846
      %879 = vst.msk [vmem:[#allocation2 + $0x61] sm:$0xff] %vm530, %v847
      %880 = vst.msk [vmem:[#allocation2 + $0x69] sm:$0xff] %vm530, %v848
      %881 = vst.msk [vmem:[#allocation2 + $0x79] sm:$0xff] %vm530, %v849
      %882 = vst.msk [vmem:[#allocation2 + $0x81] sm:$0xff] %vm530, %v850
      %883 = vst.msk [vmem:[#allocation2 + $0x91] sm:$0xff] %vm530, %v851
      %884 = vst.msk [vmem:[#allocation2 + $0x99] sm:$0xff] %vm530, %v852
      %885 = vst.msk [vmem:[#allocation2 + $0xa9] sm:$0xff] %vm530, %v853
      %886 = vst.msk [vmem:[#allocation2 + $0xb1] sm:$0xff] %vm530, %v854
      %887 = vst.msk [vmem:[#allocation2 + $0xc1] sm:$0xff] %vm530, %v855
      %888 = vst.msk [vmem:[#allocation2 + $0xc9] sm:$0xff] %vm530, %v856
      %889 = vst.msk [vmem:[#allocation2 + $0xd9] sm:$0xff] %vm530, %v857
      %890 = vst.msk [vmem:[#allocation2 + $0xe1] sm:$0xff] %vm530, %v858
      %891 = vst.msk [vmem:[#allocation2 + $0xf1] sm:$0xff] %vm530, %v859
      %892 = vst.msk [vmem:[#allocation2 + $0xf9] sm:$0xff] %vm530, %v860
      %893 = vst.msk [vmem:[#allocation2 + $0x109] sm:$0xff] %vm530, %v861
      %894 = vst.msk [vmem:[#allocation2 + $0x111] sm:$0xff] %vm530, %v862
      %895 = vst.msk [vmem:[#allocation2 + $0x121] sm:$0xff] %vm530, %v863
      %896 = vst.msk [vmem:[#allocation2 + $0x129] sm:$0xff] %vm530, %v864
      %897 = vst.msk [vmem:[#allocation2 + $0x139] sm:$0xff] %vm530, %v865
      %898 = vst.msk [vmem:[#allocation2 + $0x141] sm:$0xff] %vm530, %v866
      %899 = vst.msk [vmem:[#allocation2 + $0x151] sm:$0xff] %vm530, %v867
      %900 = vst.msk [vmem:[#allocation2 + $0x159] sm:$0xff] %vm530, %v868
      %901 = vst.msk [vmem:[#allocation2 + $0x169] sm:$0xff] %vm530, %v869
      %902 = vst.msk [vmem:[#allocation2 + $0x171] sm:$0xff] %vm530, %v870
      %s903 = scalar_lea.vmem [#allocation2], 24
      %v904 = vld [vmem:[%s903] sm:$0xff]
      %v905 = vld [vmem:[%s903 + $0x8] sm:$0xff]
      %v906 = vld [vmem:[%s903 + $0x18] sm:$0xff]
      %v907 = vld [vmem:[%s903 + $0x20] sm:$0xff]
      %v908 = vld [vmem:[%s903 + $0x30] sm:$0xff]
      %v909 = vld [vmem:[%s903 + $0x38] sm:$0xff]
      %v910 = vld [vmem:[%s903 + $0x48] sm:$0xff]
      %v911 = vld [vmem:[%s903 + $0x50] sm:$0xff]
      %v912 = vld [vmem:[%s903 + $0x60] sm:$0xff]
      %v913 = vld [vmem:[%s903 + $0x68] sm:$0xff]
      %v914 = vld [vmem:[%s903 + $0x78] sm:$0xff]
      %v915 = vld [vmem:[%s903 + $0x80] sm:$0xff]
      %v916 = vld [vmem:[%s903 + $0x90] sm:$0xff]
      %v917 = vld [vmem:[%s903 + $0x98] sm:$0xff]
      %v918 = vld [vmem:[%s903 + $0xa8] sm:$0xff]
      %v919 = vld [vmem:[%s903 + $0xb0] sm:$0xff]
      %v920 = vld [vmem:[%s903 + $0xc0] sm:$0xff]
      %v921 = vld [vmem:[%s903 + $0xc8] sm:$0xff]
      %v922 = vld [vmem:[%s903 + $0xd8] sm:$0xff]
      %v923 = vld [vmem:[%s903 + $0xe0] sm:$0xff]
      %v924 = vld [vmem:[%s903 + $0xf0] sm:$0xff]
      %v925 = vld [vmem:[%s903 + $0xf8] sm:$0xff]
      %v926 = vld [vmem:[%s903 + $0x108] sm:$0xff]
      %v927 = vld [vmem:[%s903 + $0x110] sm:$0xff]
      %v928 = vld [vmem:[%s903 + $0x120] sm:$0xff]
      %v929 = vld [vmem:[%s903 + $0x128] sm:$0xff]
      %v930 = vld [vmem:[%s903 + $0x138] sm:$0xff]
      %v931 = vld [vmem:[%s903 + $0x140] sm:$0xff]
      %v932 = vld [vmem:[%s903 + $0x150] sm:$0xff]
      %v933 = vld [vmem:[%s903 + $0x158] sm:$0xff]
      %v934 = vld [vmem:[%s903 + $0x168] sm:$0xff]
      %v935 = vld [vmem:[%s903 + $0x170] sm:$0xff]
      %936 = vrot.lane.b32.xlu0 %v372, 64
      %v937 = vpop.permute.xlu0 %936
      %938 = vrot.lane.b32.xlu0 %v377, 64
      %v939 = vpop.permute.xlu0 %938
      %940 = vrot.lane.b32.xlu0 %v382, 64
      %v941 = vpop.permute.xlu0 %940
      %942 = vrot.lane.b32.xlu0 %v387, 64
      %v943 = vpop.permute.xlu0 %942
      %944 = vrot.lane.b32.xlu0 %v392, 64
      %v945 = vpop.permute.xlu0 %944
      %946 = vrot.lane.b32.xlu0 %v397, 64
      %v947 = vpop.permute.xlu0 %946
      %948 = vrot.lane.b32.xlu0 %v402, 64
      %v949 = vpop.permute.xlu0 %948
      %950 = vrot.lane.b32.xlu0 %v407, 64
      %v951 = vpop.permute.xlu0 %950
      %952 = vrot.lane.b32.xlu0 %v412, 64
      %v953 = vpop.permute.xlu0 %952
      %954 = vrot.lane.b32.xlu0 %v417, 64
      %v955 = vpop.permute.xlu0 %954
      %956 = vrot.lane.b32.xlu0 %v422, 64
      %v957 = vpop.permute.xlu0 %956
      %958 = vrot.lane.b32.xlu0 %v427, 64
      %v959 = vpop.permute.xlu0 %958
      %960 = vrot.lane.b32.xlu0 %v432, 64
      %v961 = vpop.permute.xlu0 %960
      %962 = vrot.lane.b32.xlu0 %v437, 64
      %v963 = vpop.permute.xlu0 %962
      %964 = vrot.lane.b32.xlu0 %v442, 64
      %v965 = vpop.permute.xlu0 %964
      %966 = vrot.lane.b32.xlu0 %v447, 64
      %v967 = vpop.permute.xlu0 %966
      %968 = vrot.lane.b32.xlu0 %v452, 64
      %v969 = vpop.permute.xlu0 %968
      %970 = vrot.lane.b32.xlu0 %v457, 64
      %v971 = vpop.permute.xlu0 %970
      %972 = vrot.lane.b32.xlu0 %v462, 64
      %v973 = vpop.permute.xlu0 %972
      %974 = vrot.lane.b32.xlu0 %v467, 64
      %v975 = vpop.permute.xlu0 %974
      %976 = vrot.lane.b32.xlu0 %v472, 64
      %v977 = vpop.permute.xlu0 %976
      %978 = vrot.lane.b32.xlu0 %v477, 64
      %v979 = vpop.permute.xlu0 %978
      %980 = vrot.lane.b32.xlu0 %v482, 64
      %v981 = vpop.permute.xlu0 %980
      %982 = vrot.lane.b32.xlu0 %v487, 64
      %v983 = vpop.permute.xlu0 %982
      %984 = vrot.lane.b32.xlu0 %v492, 64
      %v985 = vpop.permute.xlu0 %984
      %986 = vrot.lane.b32.xlu0 %v497, 64
      %v987 = vpop.permute.xlu0 %986
      %988 = vrot.lane.b32.xlu0 %v502, 64
      %v989 = vpop.permute.xlu0 %988
      %990 = vrot.lane.b32.xlu0 %v507, 64
      %v991 = vpop.permute.xlu0 %990
      %992 = vrot.lane.b32.xlu0 %v512, 64
      %v993 = vpop.permute.xlu0 %992
      %994 = vrot.lane.b32.xlu0 %v517, 64
      %v995 = vpop.permute.xlu0 %994
      %996 = vrot.lane.b32.xlu0 %v522, 64
      %v997 = vpop.permute.xlu0 %996
      %998 = vrot.lane.b32.xlu0 %v527, 64
      %v999 = vpop.permute.xlu0 %998
      %v1032 = vadd.f32 %v904, %v937
      %v1033 = vadd.f32 %v905, %v939
      %v1034 = vadd.f32 %v906, %v941
      %v1035 = vadd.f32 %v907, %v943
      %v1036 = vadd.f32 %v908, %v945
      %v1037 = vadd.f32 %v909, %v947
      %v1038 = vadd.f32 %v910, %v949
      %v1039 = vadd.f32 %v911, %v951
      %v1040 = vadd.f32 %v912, %v953
      %v1041 = vadd.f32 %v913, %v955
      %v1042 = vadd.f32 %v914, %v957
      %v1043 = vadd.f32 %v915, %v959
      %v1044 = vadd.f32 %v916, %v961
      %v1045 = vadd.f32 %v917, %v963
      %v1046 = vadd.f32 %v918, %v965
      %v1047 = vadd.f32 %v919, %v967
      %v1048 = vadd.f32 %v920, %v969
      %v1049 = vadd.f32 %v921, %v971
      %v1050 = vadd.f32 %v922, %v973
      %v1051 = vadd.f32 %v923, %v975
      %v1052 = vadd.f32 %v924, %v977
      %v1053 = vadd.f32 %v925, %v979
      %v1054 = vadd.f32 %v926, %v981
      %v1055 = vadd.f32 %v927, %v983
      %v1056 = vadd.f32 %v928, %v985
      %v1057 = vadd.f32 %v929, %v987
      %v1058 = vadd.f32 %v930, %v989
      %v1059 = vadd.f32 %v931, %v991
      %v1060 = vadd.f32 %v932, %v993
      %v1061 = vadd.f32 %v933, %v995
      %v1062 = vadd.f32 %v934, %v997
      %v1063 = vadd.f32 %v935, %v999
      %1064 = vst.msk [vmem:[%s903] sm:$0xff] %vm530, %v1032
      %1065 = vst.msk [vmem:[%s903 + $0x8] sm:$0xff] %vm530, %v1033
      %1066 = vst.msk [vmem:[%s903 + $0x18] sm:$0xff] %vm530, %v1034
      %1067 = vst.msk [vmem:[%s903 + $0x20] sm:$0xff] %vm530, %v1035
      %1068 = vst.msk [vmem:[%s903 + $0x30] sm:$0xff] %vm530, %v1036
      %1069 = vst.msk [vmem:[%s903 + $0x38] sm:$0xff] %vm530, %v1037
      %1070 = vst.msk [vmem:[%s903 + $0x48] sm:$0xff] %vm530, %v1038
      %1071 = vst.msk [vmem:[%s903 + $0x50] sm:$0xff] %vm530, %v1039
      %1072 = vst.msk [vmem:[%s903 + $0x60] sm:$0xff] %vm530, %v1040
      %1073 = vst.msk [vmem:[%s903 + $0x68] sm:$0xff] %vm530, %v1041
      %1074 = vst.msk [vmem:[%s903 + $0x78] sm:$0xff] %vm530, %v1042
      %1075 = vst.msk [vmem:[%s903 + $0x80] sm:$0xff] %vm530, %v1043
      %1076 = vst.msk [vmem:[%s903 + $0x90] sm:$0xff] %vm530, %v1044
      %1077 = vst.msk [vmem:[%s903 + $0x98] sm:$0xff] %vm530, %v1045
      %1078 = vst.msk [vmem:[%s903 + $0xa8] sm:$0xff] %vm530, %v1046
      %1079 = vst.msk [vmem:[%s903 + $0xb0] sm:$0xff] %vm530, %v1047
      %1080 = vst.msk [vmem:[%s903 + $0xc0] sm:$0xff] %vm530, %v1048
      %1081 = vst.msk [vmem:[%s903 + $0xc8] sm:$0xff] %vm530, %v1049
      %1082 = vst.msk [vmem:[%s903 + $0xd8] sm:$0xff] %vm530, %v1050
      %1083 = vst.msk [vmem:[%s903 + $0xe0] sm:$0xff] %vm530, %v1051
      %1084 = vst.msk [vmem:[%s903 + $0xf0] sm:$0xff] %vm530, %v1052
      %1085 = vst.msk [vmem:[%s903 + $0xf8] sm:$0xff] %vm530, %v1053
      %1086 = vst.msk [vmem:[%s903 + $0x108] sm:$0xff] %vm530, %v1054
      %1087 = vst.msk [vmem:[%s903 + $0x110] sm:$0xff] %vm530, %v1055
      %1088 = vst.msk [vmem:[%s903 + $0x120] sm:$0xff] %vm530, %v1056
      %1089 = vst.msk [vmem:[%s903 + $0x128] sm:$0xff] %vm530, %v1057
      %1090 = vst.msk [vmem:[%s903 + $0x138] sm:$0xff] %vm530, %v1058
      %1091 = vst.msk [vmem:[%s903 + $0x140] sm:$0xff] %vm530, %v1059
      %1092 = vst.msk [vmem:[%s903 + $0x150] sm:$0xff] %vm530, %v1060
      %1093 = vst.msk [vmem:[%s903 + $0x158] sm:$0xff] %vm530, %v1061
      %1094 = vst.msk [vmem:[%s903 + $0x168] sm:$0xff] %vm530, %v1062
      %1095 = vst.msk [vmem:[%s903 + $0x170] sm:$0xff] %vm530, %v1063
      %v1096 = vld [vmem:[%s903 + $0x1] sm:$0xff]
      %v1097 = vld [vmem:[%s903 + $0x9] sm:$0xff]
      %v1098 = vld [vmem:[%s903 + $0x19] sm:$0xff]
      %v1099 = vld [vmem:[%s903 + $0x21] sm:$0xff]
      %v1100 = vld [vmem:[%s903 + $0x31] sm:$0xff]
      %v1101 = vld [vmem:[%s903 + $0x39] sm:$0xff]
      %v1102 = vld [vmem:[%s903 + $0x49] sm:$0xff]
      %v1103 = vld [vmem:[%s903 + $0x51] sm:$0xff]
      %v1104 = vld [vmem:[%s903 + $0x61] sm:$0xff]
      %v1105 = vld [vmem:[%s903 + $0x69] sm:$0xff]
      %v1106 = vld [vmem:[%s903 + $0x79] sm:$0xff]
      %v1107 = vld [vmem:[%s903 + $0x81] sm:$0xff]
      %v1108 = vld [vmem:[%s903 + $0x91] sm:$0xff]
      %v1109 = vld [vmem:[%s903 + $0x99] sm:$0xff]
      %v1110 = vld [vmem:[%s903 + $0xa9] sm:$0xff]
      %v1111 = vld [vmem:[%s903 + $0xb1] sm:$0xff]
      %v1112 = vld [vmem:[%s903 + $0xc1] sm:$0xff]
      %v1113 = vld [vmem:[%s903 + $0xc9] sm:$0xff]
      %v1114 = vld [vmem:[%s903 + $0xd9] sm:$0xff]
      %v1115 = vld [vmem:[%s903 + $0xe1] sm:$0xff]
      %v1116 = vld [vmem:[%s903 + $0xf1] sm:$0xff]
      %v1117 = vld [vmem:[%s903 + $0xf9] sm:$0xff]
      %v1118 = vld [vmem:[%s903 + $0x109] sm:$0xff]
      %v1119 = vld [vmem:[%s903 + $0x111] sm:$0xff]
      %v1120 = vld [vmem:[%s903 + $0x121] sm:$0xff]
      %v1121 = vld [vmem:[%s903 + $0x129] sm:$0xff]
      %v1122 = vld [vmem:[%s903 + $0x139] sm:$0xff]
      %v1123 = vld [vmem:[%s903 + $0x141] sm:$0xff]
      %v1124 = vld [vmem:[%s903 + $0x151] sm:$0xff]
      %v1125 = vld [vmem:[%s903 + $0x159] sm:$0xff]
      %v1126 = vld [vmem:[%s903 + $0x169] sm:$0xff]
      %v1127 = vld [vmem:[%s903 + $0x171] sm:$0xff]
      %1128 = vrot.lane.b32.xlu0 %v372, 32
      %v1129 = vpop.permute.xlu0 %1128
      %1130 = vrot.lane.b32.xlu0 %v377, 32
      %v1131 = vpop.permute.xlu0 %1130
      %1132 = vrot.lane.b32.xlu0 %v382, 32
      %v1133 = vpop.permute.xlu0 %1132
      %1134 = vrot.lane.b32.xlu0 %v387, 32
      %v1135 = vpop.permute.xlu0 %1134
      %1136 = vrot.lane.b32.xlu0 %v392, 32
      %v1137 = vpop.permute.xlu0 %1136
      %1138 = vrot.lane.b32.xlu0 %v397, 32
      %v1139 = vpop.permute.xlu0 %1138
      %1140 = vrot.lane.b32.xlu0 %v402, 32
      %v1141 = vpop.permute.xlu0 %1140
      %1142 = vrot.lane.b32.xlu0 %v407, 32
      %v1143 = vpop.permute.xlu0 %1142
      %1144 = vrot.lane.b32.xlu0 %v412, 32
      %v1145 = vpop.permute.xlu0 %1144
      %1146 = vrot.lane.b32.xlu0 %v417, 32
      %v1147 = vpop.permute.xlu0 %1146
      %1148 = vrot.lane.b32.xlu0 %v422, 32
      %v1149 = vpop.permute.xlu0 %1148
      %1150 = vrot.lane.b32.xlu0 %v427, 32
      %v1151 = vpop.permute.xlu0 %1150
      %1152 = vrot.lane.b32.xlu0 %v432, 32
      %v1153 = vpop.permute.xlu0 %1152
      %1154 = vrot.lane.b32.xlu0 %v437, 32
      %v1155 = vpop.permute.xlu0 %1154
      %1156 = vrot.lane.b32.xlu0 %v442, 32
      %v1157 = vpop.permute.xlu0 %1156
      %1158 = vrot.lane.b32.xlu0 %v447, 32
      %v1159 = vpop.permute.xlu0 %1158
      %1160 = vrot.lane.b32.xlu0 %v452, 32
      %v1161 = vpop.permute.xlu0 %1160
      %1162 = vrot.lane.b32.xlu0 %v457, 32
      %v1163 = vpop.permute.xlu0 %1162
      %1164 = vrot.lane.b32.xlu0 %v462, 32
      %v1165 = vpop.permute.xlu0 %1164
      %1166 = vrot.lane.b32.xlu0 %v467, 32
      %v1167 = vpop.permute.xlu0 %1166
      %1168 = vrot.lane.b32.xlu0 %v472, 32
      %v1169 = vpop.permute.xlu0 %1168
      %1170 = vrot.lane.b32.xlu0 %v477, 32
      %v1171 = vpop.permute.xlu0 %1170
      %1172 = vrot.lane.b32.xlu0 %v482, 32
      %v1173 = vpop.permute.xlu0 %1172
      %1174 = vrot.lane.b32.xlu0 %v487, 32
      %v1175 = vpop.permute.xlu0 %1174
      %1176 = vrot.lane.b32.xlu0 %v492, 32
      %v1177 = vpop.permute.xlu0 %1176
      %1178 = vrot.lane.b32.xlu0 %v497, 32
      %v1179 = vpop.permute.xlu0 %1178
      %1180 = vrot.lane.b32.xlu0 %v502, 32
      %v1181 = vpop.permute.xlu0 %1180
      %1182 = vrot.lane.b32.xlu0 %v507, 32
      %v1183 = vpop.permute.xlu0 %1182
      %1184 = vrot.lane.b32.xlu0 %v512, 32
      %v1185 = vpop.permute.xlu0 %1184
      %1186 = vrot.lane.b32.xlu0 %v517, 32
      %v1187 = vpop.permute.xlu0 %1186
      %1188 = vrot.lane.b32.xlu0 %v522, 32
      %v1189 = vpop.permute.xlu0 %1188
      %1190 = vrot.lane.b32.xlu0 %v527, 32
      %v1191 = vpop.permute.xlu0 %1190
      %v1224 = vadd.f32 %v1096, %v1129
      %v1225 = vadd.f32 %v1097, %v1131
      %v1226 = vadd.f32 %v1098, %v1133
      %v1227 = vadd.f32 %v1099, %v1135
      %v1228 = vadd.f32 %v1100, %v1137
      %v1229 = vadd.f32 %v1101, %v1139
      %v1230 = vadd.f32 %v1102, %v1141
      %v1231 = vadd.f32 %v1103, %v1143
      %v1232 = vadd.f32 %v1104, %v1145
      %v1233 = vadd.f32 %v1105, %v1147
      %v1234 = vadd.f32 %v1106, %v1149
      %v1235 = vadd.f32 %v1107, %v1151
      %v1236 = vadd.f32 %v1108, %v1153
      %v1237 = vadd.f32 %v1109, %v1155
      %v1238 = vadd.f32 %v1110, %v1157
      %v1239 = vadd.f32 %v1111, %v1159
      %v1240 = vadd.f32 %v1112, %v1161
      %v1241 = vadd.f32 %v1113, %v1163
      %v1242 = vadd.f32 %v1114, %v1165
      %v1243 = vadd.f32 %v1115, %v1167
      %v1244 = vadd.f32 %v1116, %v1169
      %v1245 = vadd.f32 %v1117, %v1171
      %v1246 = vadd.f32 %v1118, %v1173
      %v1247 = vadd.f32 %v1119, %v1175
      %v1248 = vadd.f32 %v1120, %v1177
      %v1249 = vadd.f32 %v1121, %v1179
      %v1250 = vadd.f32 %v1122, %v1181
      %v1251 = vadd.f32 %v1123, %v1183
      %v1252 = vadd.f32 %v1124, %v1185
      %v1253 = vadd.f32 %v1125, %v1187
      %v1254 = vadd.f32 %v1126, %v1189
      %v1255 = vadd.f32 %v1127, %v1191
      %1256 = vst.msk [vmem:[%s903 + $0x1] sm:$0xff] %vm530, %v1224
      %1257 = vst.msk [vmem:[%s903 + $0x9] sm:$0xff] %vm530, %v1225
      %1258 = vst.msk [vmem:[%s903 + $0x19] sm:$0xff] %vm530, %v1226
      %1259 = vst.msk [vmem:[%s903 + $0x21] sm:$0xff] %vm530, %v1227
      %1260 = vst.msk [vmem:[%s903 + $0x31] sm:$0xff] %vm530, %v1228
      %1261 = vst.msk [vmem:[%s903 + $0x39] sm:$0xff] %vm530, %v1229
      %1262 = vst.msk [vmem:[%s903 + $0x49] sm:$0xff] %vm530, %v1230
      %1263 = vst.msk [vmem:[%s903 + $0x51] sm:$0xff] %vm530, %v1231
      %1264 = vst.msk [vmem:[%s903 + $0x61] sm:$0xff] %vm530, %v1232
      %1265 = vst.msk [vmem:[%s903 + $0x69] sm:$0xff] %vm530, %v1233
      %1266 = vst.msk [vmem:[%s903 + $0x79] sm:$0xff] %vm530, %v1234
      %1267 = vst.msk [vmem:[%s903 + $0x81] sm:$0xff] %vm530, %v1235
      %1268 = vst.msk [vmem:[%s903 + $0x91] sm:$0xff] %vm530, %v1236
      %1269 = vst.msk [vmem:[%s903 + $0x99] sm:$0xff] %vm530, %v1237
      %1270 = vst.msk [vmem:[%s903 + $0xa9] sm:$0xff] %vm530, %v1238
      %1271 = vst.msk [vmem:[%s903 + $0xb1] sm:$0xff] %vm530, %v1239
      %1272 = vst.msk [vmem:[%s903 + $0xc1] sm:$0xff] %vm530, %v1240
      %1273 = vst.msk [vmem:[%s903 + $0xc9] sm:$0xff] %vm530, %v1241
      %1274 = vst.msk [vmem:[%s903 + $0xd9] sm:$0xff] %vm530, %v1242
      %1275 = vst.msk [vmem:[%s903 + $0xe1] sm:$0xff] %vm530, %v1243
      %1276 = vst.msk [vmem:[%s903 + $0xf1] sm:$0xff] %vm530, %v1244
      %1277 = vst.msk [vmem:[%s903 + $0xf9] sm:$0xff] %vm530, %v1245
      %1278 = vst.msk [vmem:[%s903 + $0x109] sm:$0xff] %vm530, %v1246
      %1279 = vst.msk [vmem:[%s903 + $0x111] sm:$0xff] %vm530, %v1247
      %1280 = vst.msk [vmem:[%s903 + $0x121] sm:$0xff] %vm530, %v1248
      %1281 = vst.msk [vmem:[%s903 + $0x129] sm:$0xff] %vm530, %v1249
      %1282 = vst.msk [vmem:[%s903 + $0x139] sm:$0xff] %vm530, %v1250
      %1283 = vst.msk [vmem:[%s903 + $0x141] sm:$0xff] %vm530, %v1251
      %1284 = vst.msk [vmem:[%s903 + $0x151] sm:$0xff] %vm530, %v1252
      %1285 = vst.msk [vmem:[%s903 + $0x159] sm:$0xff] %vm530, %v1253
      %1286 = vst.msk [vmem:[%s903 + $0x169] sm:$0xff] %vm530, %v1254
      %1287 = vst.msk [vmem:[%s903 + $0x171] sm:$0xff] %vm530, %v1255
      %v1288 = vld [vmem:[#allocation2] sm:$0xff]
      %v1289 = vld [vmem:[#allocation2 + $0x8] sm:$0xff]
      %v1290 = vld [vmem:[#allocation2 + $0x10] sm:$0x1]
      %v1291 = vld [vmem:[#allocation2 + $0x18] sm:$0xff]
      %v1292 = vld [vmem:[#allocation2 + $0x20] sm:$0xff]
      %v1293 = vld [vmem:[#allocation2 + $0x28] sm:$0x1]
      %v1294 = vld [vmem:[#allocation2 + $0x30] sm:$0xff]
      %v1295 = vld [vmem:[#allocation2 + $0x38] sm:$0xff]
      %v1296 = vld [vmem:[#allocation2 + $0x40] sm:$0x1]
      %v1297 = vld [vmem:[#allocation2 + $0x48] sm:$0xff]
      %v1298 = vld [vmem:[#allocation2 + $0x50] sm:$0xff]
      %v1299 = vld [vmem:[#allocation2 + $0x58] sm:$0x1]
      %v1300 = vld [vmem:[#allocation2 + $0x60] sm:$0xff]
      %v1301 = vld [vmem:[#allocation2 + $0x68] sm:$0xff]
      %v1302 = vld [vmem:[#allocation2 + $0x70] sm:$0x1]
      %v1303 = vld [vmem:[#allocation2 + $0x78] sm:$0xff]
      %v1304 = vld [vmem:[#allocation2 + $0x80] sm:$0xff]
      %v1305 = vld [vmem:[#allocation2 + $0x88] sm:$0x1]
      %v1306 = vld [vmem:[#allocation2 + $0x90] sm:$0xff]
      %v1307 = vld [vmem:[#allocation2 + $0x98] sm:$0xff]
      %v1308 = vld [vmem:[#allocation2 + $0xa0] sm:$0x1]
      %v1309 = vld [vmem:[#allocation2 + $0xa8] sm:$0xff]
      %v1310 = vld [vmem:[#allocation2 + $0xb0] sm:$0xff]
      %v1311 = vld [vmem:[#allocation2 + $0xb8] sm:$0x1]
      %v1312 = vld [vmem:[#allocation2 + $0xc0] sm:$0xff]
      %v1313 = vld [vmem:[#allocation2 + $0xc8] sm:$0xff]
      %v1314 = vld [vmem:[#allocation2 + $0xd0] sm:$0x1]
      %v1315 = vld [vmem:[#allocation2 + $0xd8] sm:$0xff]
      %v1316 = vld [vmem:[#allocation2 + $0xe0] sm:$0xff]
      %v1317 = vld [vmem:[#allocation2 + $0xe8] sm:$0x1]
      %v1318 = vld [vmem:[#allocation2 + $0xf0] sm:$0xff]
      %v1319 = vld [vmem:[#allocation2 + $0xf8] sm:$0xff]
      %v1320 = vld [vmem:[#allocation2 + $0x100] sm:$0x1]
      %v1321 = vld [vmem:[#allocation2 + $0x108] sm:$0xff]
      %v1322 = vld [vmem:[#allocation2 + $0x110] sm:$0xff]
      %v1323 = vld [vmem:[#allocation2 + $0x118] sm:$0x1]
      %v1324 = vld [vmem:[#allocation2 + $0x120] sm:$0xff]
      %v1325 = vld [vmem:[#allocation2 + $0x128] sm:$0xff]
      %v1326 = vld [vmem:[#allocation2 + $0x130] sm:$0x1]
      %v1327 = vld [vmem:[#allocation2 + $0x138] sm:$0xff]
      %v1328 = vld [vmem:[#allocation2 + $0x140] sm:$0xff]
      %v1329 = vld [vmem:[#allocation2 + $0x148] sm:$0x1]
      %v1330 = vld [vmem:[#allocation2 + $0x150] sm:$0xff]
      %v1331 = vld [vmem:[#allocation2 + $0x158] sm:$0xff]
      %v1332 = vld [vmem:[#allocation2 + $0x160] sm:$0x1]
      %v1333 = vld [vmem:[#allocation2 + $0x168] sm:$0xff]
      %v1334 = vld [vmem:[#allocation2 + $0x170] sm:$0xff]
      %v1335 = vld [vmem:[#allocation2 + $0x178] sm:$0x1]
      %v1336 = vld [vmem:[#allocation2 + $0x180] sm:$0xff]
      %v1337 = vld [vmem:[#allocation2 + $0x188] sm:$0xff]
      %v1338 = vld [vmem:[#allocation2 + $0x190] sm:$0x1]
      %v1339 = vld [vmem:[%s2] sm:$0x1]
      %v1341 = vlaneseq
      %v1342 = vshrl.u32 %v1341, 7
      %v1343 = vsub.s32 0, %v1342
      %v1344 = vrot.slane %v1339, %v1343
      %v1346 = vadd.f32 %v1288, %v1344
      %v1347 = vadd.f32 %v1289, %v1344
      %v1348 = vadd.f32 %v1290, %v1344
      %v1349 = vadd.f32 %v1291, %v1344
      %v1350 = vadd.f32 %v1292, %v1344
      %v1351 = vadd.f32 %v1293, %v1344
      %v1352 = vadd.f32 %v1294, %v1344
      %v1353 = vadd.f32 %v1295, %v1344
      %v1354 = vadd.f32 %v1296, %v1344
      %v1355 = vadd.f32 %v1297, %v1344
      %v1356 = vadd.f32 %v1298, %v1344
      %v1357 = vadd.f32 %v1299, %v1344
      %v1358 = vadd.f32 %v1300, %v1344
      %v1359 = vadd.f32 %v1301, %v1344
      %v1360 = vadd.f32 %v1302, %v1344
      %v1361 = vadd.f32 %v1303, %v1344
      %v1362 = vadd.f32 %v1304, %v1344
      %v1363 = vadd.f32 %v1305, %v1344
      %v1364 = vadd.f32 %v1306, %v1344
      %v1365 = vadd.f32 %v1307, %v1344
      %v1366 = vadd.f32 %v1308, %v1344
      %v1367 = vadd.f32 %v1309, %v1344
      %v1368 = vadd.f32 %v1310, %v1344
      %v1369 = vadd.f32 %v1311, %v1344
      %v1370 = vadd.f32 %v1312, %v1344
      %v1371 = vadd.f32 %v1313, %v1344
      %v1372 = vadd.f32 %v1314, %v1344
      %v1373 = vadd.f32 %v1315, %v1344
      %v1374 = vadd.f32 %v1316, %v1344
      %v1375 = vadd.f32 %v1317, %v1344
      %v1376 = vadd.f32 %v1318, %v1344
      %v1377 = vadd.f32 %v1319, %v1344
      %v1378 = vadd.f32 %v1320, %v1344
      %v1379 = vadd.f32 %v1321, %v1344
      %v1380 = vadd.f32 %v1322, %v1344
      %v1381 = vadd.f32 %v1323, %v1344
      %v1382 = vadd.f32 %v1324, %v1344
      %v1383 = vadd.f32 %v1325, %v1344
      %v1384 = vadd.f32 %v1326, %v1344
      %v1385 = vadd.f32 %v1327, %v1344
      %v1386 = vadd.f32 %v1328, %v1344
      %v1387 = vadd.f32 %v1329, %v1344
      %v1388 = vadd.f32 %v1330, %v1344
      %v1389 = vadd.f32 %v1331, %v1344
      %v1390 = vadd.f32 %v1332, %v1344
      %v1391 = vadd.f32 %v1333, %v1344
      %v1392 = vadd.f32 %v1334, %v1344
      %v1393 = vadd.f32 %v1335, %v1344
      %v1394 = vadd.f32 %v1336, %v1344
      %v1395 = vadd.f32 %v1337, %v1344
      %v1396 = vadd.f32 %v1338, %v1344
      %1397 = vst.msk [vmem:[%s170] sm:$0xff] %vm530, %v1346
      %1398 = vst.msk [vmem:[%s170 + $0x8] sm:$0xff] %vm530, %v1347
      %1399 = vst.msk [vmem:[%s170 + $0x10] sm:$0x1] %vm533, %v1348
      %1400 = vst.msk [vmem:[%s170 + $0x18] sm:$0xff] %vm530, %v1349
      %1401 = vst.msk [vmem:[%s170 + $0x20] sm:$0xff] %vm530, %v1350
      %1402 = vst.msk [vmem:[%s170 + $0x28] sm:$0x1] %vm533, %v1351
      %1403 = vst.msk [vmem:[%s170 + $0x30] sm:$0xff] %vm530, %v1352
      %1404 = vst.msk [vmem:[%s170 + $0x38] sm:$0xff] %vm530, %v1353
      %1405 = vst.msk [vmem:[%s170 + $0x40] sm:$0x1] %vm533, %v1354
      %1406 = vst.msk [vmem:[%s170 + $0x48] sm:$0xff] %vm530, %v1355
      %1407 = vst.msk [vmem:[%s170 + $0x50] sm:$0xff] %vm530, %v1356
      %1408 = vst.msk [vmem:[%s170 + $0x58] sm:$0x1] %vm533, %v1357
      %1409 = vst.msk [vmem:[%s170 + $0x60] sm:$0xff] %vm530, %v1358
      %1410 = vst.msk [vmem:[%s170 + $0x68] sm:$0xff] %vm530, %v1359
      %1411 = vst.msk [vmem:[%s170 + $0x70] sm:$0x1] %vm533, %v1360
      %1412 = vst.msk [vmem:[%s170 + $0x78] sm:$0xff] %vm530, %v1361
      %1413 = vst.msk [vmem:[%s170 + $0x80] sm:$0xff] %vm530, %v1362
      %1414 = vst.msk [vmem:[%s170 + $0x88] sm:$0x1] %vm533, %v1363
      %1415 = vst.msk [vmem:[%s170 + $0x90] sm:$0xff] %vm530, %v1364
      %1416 = vst.msk [vmem:[%s170 + $0x98] sm:$0xff] %vm530, %v1365
      %1417 = vst.msk [vmem:[%s170 + $0xa0] sm:$0x1] %vm533, %v1366
      %1418 = vst.msk [vmem:[%s170 + $0xa8] sm:$0xff] %vm530, %v1367
      %1419 = vst.msk [vmem:[%s170 + $0xb0] sm:$0xff] %vm530, %v1368
      %1420 = vst.msk [vmem:[%s170 + $0xb8] sm:$0x1] %vm533, %v1369
      %1421 = vst.msk [vmem:[%s170 + $0xc0] sm:$0xff] %vm530, %v1370
      %1422 = vst.msk [vmem:[%s170 + $0xc8] sm:$0xff] %vm530, %v1371
      %1423 = vst.msk [vmem:[%s170 + $0xd0] sm:$0x1] %vm533, %v1372
      %1424 = vst.msk [vmem:[%s170 + $0xd8] sm:$0xff] %vm530, %v1373
      %1425 = vst.msk [vmem:[%s170 + $0xe0] sm:$0xff] %vm530, %v1374
      %1426 = vst.msk [vmem:[%s170 + $0xe8] sm:$0x1] %vm533, %v1375
      %1427 = vst.msk [vmem:[%s170 + $0xf0] sm:$0xff] %vm530, %v1376
      %1428 = vst.msk [vmem:[%s170 + $0xf8] sm:$0xff] %vm530, %v1377
      %1429 = vst.msk [vmem:[%s170 + $0x100] sm:$0x1] %vm533, %v1378
      %1430 = vst.msk [vmem:[%s170 + $0x108] sm:$0xff] %vm530, %v1379
      %1431 = vst.msk [vmem:[%s170 + $0x110] sm:$0xff] %vm530, %v1380
      %1432 = vst.msk [vmem:[%s170 + $0x118] sm:$0x1] %vm533, %v1381
      %1433 = vst.msk [vmem:[%s170 + $0x120] sm:$0xff] %vm530, %v1382
      %1434 = vst.msk [vmem:[%s170 + $0x128] sm:$0xff] %vm530, %v1383
      %1435 = vst.msk [vmem:[%s170 + $0x130] sm:$0x1] %vm533, %v1384
      %1436 = vst.msk [vmem:[%s170 + $0x138] sm:$0xff] %vm530, %v1385
      %1437 = vst.msk [vmem:[%s170 + $0x140] sm:$0xff] %vm530, %v1386
      %1438 = vst.msk [vmem:[%s170 + $0x148] sm:$0x1] %vm533, %v1387
      %1439 = vst.msk [vmem:[%s170 + $0x150] sm:$0xff] %vm530, %v1388
      %1440 = vst.msk [vmem:[%s170 + $0x158] sm:$0xff] %vm530, %v1389
      %1441 = vst.msk [vmem:[%s170 + $0x160] sm:$0x1] %vm533, %v1390
      %1442 = vst.msk [vmem:[%s170 + $0x168] sm:$0xff] %vm530, %v1391
      %1443 = vst.msk [vmem:[%s170 + $0x170] sm:$0xff] %vm530, %v1392
      %1444 = vst.msk [vmem:[%s170 + $0x178] sm:$0x1] %vm533, %v1393
      %1445 = vst.msk [vmem:[%s170 + $0x180] sm:$0xff] %vm530, %v1394
      %1446 = vst.msk [vmem:[%s170 + $0x188] sm:$0xff] %vm530, %v1395
      %1447 = vst.msk [vmem:[%s170 + $0x190] sm:$0x1] %vm533, %v1396
      %p1448 = scmp.lt.s32.totalorder %s14, 1
      %s1449 = scalar_select %p1448, %s14, 1
      %s1450 = smul.addr %s1449, 51
      %s1451 = smul.addr %s1450, 8
      %s1452 = scalar_lea.vmem %s3, %s1451
      // Predicated region
      $region33: #{upsample_forward.1} parent=31 // pred_check
        %p1453 = pneg %p100
      $region34: #{upsample_forward.1} parent=31 // pred_check_branch
        %1455 = sbr.rel (%p1453) target = $region36
      $region35: #{upsample_forward.1} parent=31 // pred_region
        _
      $region36: #{upsample_forward.1} parent=31 // pred_fallthru
        _
    $region32: #{upsample_forward.1} parent=5 // pred_fallthru
      _
    %p1456 = scmp.le.s32.totalorder 2, %s9
    // Predicated region
    $region37: #{upsample_forward.1} parent=5 // pred_check
      %p1457 = pneg %p1456
    $region38: #{upsample_forward.1} parent=5 // pred_check_branch
      %1459 = sbr.rel (%p1457) target = $region40
    $region39: #{upsample_forward.1} parent=5 // pred_region
      %s1460 = ssub.s32 %s9, 2
      // Predicated region
      $region41: #{upsample_forward.1} parent=39 // pred_check
        %p1461 = pneg %p106
      $region42: #{upsample_forward.1} parent=39 // pred_check_branch
        %1463 = sbr.rel (%p1461) target = $region44
      $region43: #{upsample_forward.1} parent=39 // pred_region
        %p1464 = scmp.lt.s32.totalorder %s15, 1
        %s1465 = scalar_select %p1464, %s15, 1
        %s1466 = smul.addr %s1465, 51
        %s1467 = smul.addr %s1466, 8
        %s1468 = scalar_lea.vmem %s3, %s1467
      $region44: #{upsample_forward.1} parent=39 // pred_fallthru
        _
    $region40: #{upsample_forward.1} parent=5 // pred_fallthru
      _
  $region6: #{upsample_forward.1} parent=0 // loop_footer
    %s13 = sadd.s32 1, %s9
  $region7: #{upsample_forward.1} parent=0 // loop_footer_branch
    %8 = sbr.rel target = $region3
  $region8: #{upsample_forward.1} parent=0 // loop_exit
    _

</llo_original>
